<compile_context>
chip_gen: v5e
topology: v5e:2x2
jax: 0.10.0
libtpu: 0.0.40
codegen_flags: <defaults>
</compile_context>

<pallas_src>
import jax
import jax.numpy as jnp
from jax.experimental import pallas as pl
from jax.experimental.pallas import tpu as pltpu


def _round_up(x, m):
    return (x + m - 1) // m * m


def _cdiv(a, b):
    return (a + b - 1) // b


# --------------------------------------------------------------------------
# Kernel: one (TILE_N, L) tile of instances -> (TILE_N, C) attention logits.
# --------------------------------------------------------------------------
def _gated_attn_kernel(x_ref, wab_ref, bab_ref, wc_ref, bc_ref, out_ref):
    d_pad = wc_ref.shape[0]

    # In-kernel cast to the compute dtype (bf16): VPU work that hides under
    # the HBM-bound x stream; avoids a separate wrapper cast pass over x.
    x = x_ref[...].astype(wab_ref.dtype)

    # Fused hidden projection: a single MXU pass produces both gate pre-acts.
    # bf16 inputs, f32 accumulate; bias add + nonlinearities in f32.
    h = jnp.dot(x, wab_ref[...], preferred_element_type=jnp.float32) + bab_ref[...]
    a = jnp.tanh(h[:, :d_pad])            # attention_a (Tanh)      (EUP)
    b = jax.nn.sigmoid(h[:, d_pad:])      # attention_b (Sigmoid)   (EUP)
    gated = (a * b).astype(wc_ref.dtype)  # (TILE_N, Dp), bf16 for native MXU

    # Final projection in natural orientation: (TILE_N, Dp) @ (Dp, C).
    # Output store is tiny ((TILE_N, C), C small) — masked store is negligible.
    out = jnp.dot(gated, wc_ref[...],
                  preferred_element_type=jnp.float32) + bc_ref[...]
    out_ref[...] = out.astype(out_ref.dtype)


# --------------------------------------------------------------------------
# One-time host-side parameter packing (hoisted out of the per-call path).
# --------------------------------------------------------------------------
def pack_attn_gated_params(wa, ba, wb, bb, wc, bc, compute_dtype=jnp.bfloat16):
    """Fuse Wa|Wb, pad the hidden dim to 128 lanes, cast weights to bf16.

    wa, wb: (L, D); ba, bb: (D,) or (1, D); wc: (D, C); bc: (C,) or (1, C).
    Padded Wa/ba columns are 0 => tanh(0)=0 zeroes the gate in padded lanes;
    padded Wc rows are 0 => no leakage into A.
    """
    L, D = wa.shape
    C = wc.shape[1]
    d_pad = _round_up(D, 128)
    pd = d_pad - D

    ba2 = jnp.reshape(ba, (1, D)).astype(jnp.float32)
    bb2 = jnp.reshape(bb, (1, D)).astype(jnp.float32)

    wab = jnp.concatenate(
        [jnp.pad(wa, ((0, 0), (0, pd))), jnp.pad(wb, ((0, 0), (0, pd)))],
        axis=1).astype(compute_dtype)                            # (L, 2*Dp)
    bab = jnp.concatenate(
        [jnp.pad(ba2, ((0, 0), (0, pd))), jnp.pad(bb2, ((0, 0), (0, pd)))],
        axis=1)                                                  # (1, 2*Dp) f32
    wc_p = jnp.pad(wc, ((0, pd), (0, 0))).astype(compute_dtype)  # (Dp, C)
    bc_p = jnp.reshape(bc, (1, C)).astype(jnp.float32)           # (1, C)

    return {"wab": wab, "bab": bab, "wc": wc_p, "bc": bc_p}


# --------------------------------------------------------------------------
# Generation-aware defaults (v5e/v6e: 128 MiB VMEM -> big tiles;
# v7x: 64 MiB/TC -> conservative).  Falls back safely if the query fails.
# --------------------------------------------------------------------------
def _pick_tiling():
    vmem_cap = 64 * 1024 * 1024
    try:
        info = pltpu.get_tpu_info()
        vmem_cap = int(getattr(info, "vmem_capacity_bytes", vmem_cap))
    except Exception:
        pass
    if vmem_cap >= 96 * 1024 * 1024:          # v5e / v6e (128 MiB VMEM)
        return 4096, 96 * 1024 * 1024
    return 2048, 48 * 1024 * 1024              # v7x (64 MiB per TC) / fallback


# --------------------------------------------------------------------------
# Forward wrapper.
# --------------------------------------------------------------------------
def attn_net_gated_forward(x, params, *, tile_n_max=None, vmem_limit_bytes=None):
    """Pallas TPU forward of Attn_Net_Gated.  Returns (A, x).

    x: (N, L) in f32 or bf16; params: output of pack_attn_gated_params.
    """
    # TODO(synk): dropout=True config (nn.Dropout(0.25)) not implemented;
    # module default / inference path is dropout=False.
    N, L = x.shape
    wab, bab, wc, bc = params["wab"], params["bab"], params["wc"], params["bc"]
    two_dp = wab.shape[1]
    d_pad, C = wc.shape

    if tile_n_max is None or vmem_limit_bytes is None:
        tn_def, vm_def = _pick_tiling()
        tile_n_max = tile_n_max or tn_def
        vmem_limit_bytes = vmem_limit_bytes or vm_def

    # Tile choice: multiple of 128, >=2 grid steps when N allows (keeps both
    # v7x TensorCores busy), capped so x double-buffers + f32 intermediates
    # stay comfortably inside the VMEM budget.
    tile_n = min(tile_n_max, max(128, _round_up(_cdiv(N, 2), 128)))
    per_row_bytes = 2 * L * x.dtype.itemsize + 2 * L + 22 * d_pad
    vmem_cap_rows = max(128, (int(vmem_limit_bytes * 0.7) // per_row_bytes)
                        // 128 * 128)
    tile_n = min(tile_n, vmem_cap_rows)
    grid = (_cdiv(N, tile_n),)

    cost = pl.CostEstimate(
        flops=2 * N * L * two_dp + 2 * N * d_pad * C + 4 * N * d_pad,
        transcendentals=2 * N * d_pad,
        bytes_accessed=(x.size * x.dtype.itemsize
                        + wab.size * wab.dtype.itemsize
                        + wc.size * wc.dtype.itemsize
                        + N * C * x.dtype.itemsize))

    a = pl.pallas_call(
        _gated_attn_kernel,
        out_shape=jax.ShapeDtypeStruct((N, C), x.dtype),
        grid_spec=pltpu.PrefetchScalarGridSpec(
            num_scalar_prefetch=0,
            grid=grid,
            in_specs=[
                pl.BlockSpec((tile_n, L), lambda i: (i, 0)),    # x (streamed)
                pl.BlockSpec((L, two_dp), lambda i: (0, 0)),    # fused Wa|Wb
                pl.BlockSpec((1, two_dp), lambda i: (0, 0)),    # fused ba|bb
                pl.BlockSpec((d_pad, C), lambda i: (0, 0)),     # Wc (padded rows 0)
                pl.BlockSpec((1, C), lambda i: (0, 0)),         # bc
            ],
            out_specs=pl.BlockSpec((tile_n, C), lambda i: (i, 0)),
        ),
        compiler_params=pltpu.CompilerParams(
            dimension_semantics=("parallel",),   # independent N tiles
            vmem_limit_bytes=vmem_limit_bytes),
        cost_estimate=cost,
    )(x, wab, bab, wc, bc)

    return a, x                                   # x passed through unchanged


def init_linear_params(key, fan_in, fan_out, dtype=jnp.float32):
    """Deterministic init matching nn.Linear default: U(-1/sqrt(fan_in), ...)."""
    kw, kb = jax.random.split(key)
    bound = 1.0 / (fan_in ** 0.5)
    w = jax.random.uniform(kw, (fan_in, fan_out), dtype, -bound, bound)
    b = jax.random.uniform(kb, (1, fan_out), dtype, -bound, bound)
    return w, b


if __name__ == "__main__":
    # Small but representative: N instances per bag, L input features,
    # D hidden (padded to 128 lanes in the packer), C = 1 attention class.
    # N=300 with the tile rule gives tile_n=256 -> 2 grid steps and a ragged
    # 44-row last tile, exercising partial-block reads/writes.
    N, L, D, C = 300, 128, 32, 1

    key = jax.random.PRNGKey(0)
    kx, ka, kb_, kc = jax.random.split(key, 4)
    x = jax.random.normal(kx, (N, L), jnp.float32)
    wa, ba = init_linear_params(ka, L, D)
    wb, bb = init_linear_params(kb_, L, D)
    wc, bc = init_linear_params(kc, D, C)

    params = pack_attn_gated_params(wa, ba, wb, bb, wc, bc)   # pack once
    A, x_out = attn_net_gated_forward(x, params)
    jax.block_until_ready((A, x_out))

    # Pure-JAX f32 reference (true PyTorch-module baseline).  The kernel uses
    # bf16 matmul inputs with f32 accumulation, so allow mixed-precision slack.
    a_ref = jnp.tanh(x @ wa + ba)
    b_ref = jax.nn.sigmoid(x @ wb + bb)
    A_ref = (a_ref * b_ref) @ wc + bc

    assert A.shape == (N, C)
    assert x_out.shape == (N, L)
    err = float(jnp.max(jnp.abs(A - A_ref)))
    assert jnp.allclose(A, A_ref, atol=5e-2, rtol=5e-2), err
    assert jnp.array_equal(x_out, x)
    print("KERNEL_OK")
</pallas_src>

<mosaic_0001>
module attributes {stable_mosaic.version = 11 : i64} {
  func.func @_gated_attn_kernel(%arg0: i32, %arg1: memref<256x128xf32, #tpu.memory_space<vmem>>, %arg2: memref<128x256xbf16, #tpu.memory_space<vmem>>, %arg3: memref<1x256xf32, #tpu.memory_space<vmem>>, %arg4: memref<128x1xbf16, #tpu.memory_space<vmem>>, %arg5: memref<1x1xf32, #tpu.memory_space<vmem>>, %arg6: memref<256x1xf32, #tpu.memory_space<vmem>>) attributes {dimension_semantics = [#tpu.dimension_semantics<parallel>], iteration_bounds = array<i64: 2>, scalar_prefetch = 0 : i64, scratch_operands = 0 : i64, tpu.core_type = #tpu.core_type<tc>, window_params = [{transform_indices = @transform_0, window_bounds = array<i64: 256, 128>}, {pipeline_mode = #tpu.pipeline_mode<synchronous>, transform_indices = @transform_1, window_bounds = array<i64: 128, 256>}, {pipeline_mode = #tpu.pipeline_mode<synchronous>, transform_indices = @transform_2, window_bounds = array<i64: 1, 256>}, {pipeline_mode = #tpu.pipeline_mode<synchronous>, transform_indices = @transform_3, window_bounds = array<i64: 128, 1>}, {pipeline_mode = #tpu.pipeline_mode<synchronous>, transform_indices = @transform_4, window_bounds = array<i64: 1, 1>}, {transform_indices = @transform_5, window_bounds = array<i64: 256, 1>}]} {
    %c0 = arith.constant 0 : index
    %c0_0 = arith.constant 0 : index
    %0 = vector.load %arg1[%c0, %c0_0] : memref<256x128xf32, #tpu.memory_space<vmem>>, vector<256x128xf32>
    %1 = arith.truncf %0 : vector<256x128xf32> to vector<256x128xbf16>
    %c0_1 = arith.constant 0 : index
    %c0_2 = arith.constant 0 : index
    %2 = vector.load %arg2[%c0_1, %c0_2] : memref<128x256xbf16, #tpu.memory_space<vmem>>, vector<128x256xbf16>
    %cst = arith.constant dense<0.000000e+00> : vector<256x256xf32>
    %3 = tpu.matmul %1, %2, %cst {dimension_numbers = #tpu.dot_dimension_numbers<[1], [0], [0], [1], [0, 0, 1, 1], [], []>} : vector<256x128xbf16>, vector<128x256xbf16>, vector<256x256xf32> -> vector<256x256xf32>
    %c0_3 = arith.constant 0 : index
    %c0_4 = arith.constant 0 : index
    %4 = vector.load %arg3[%c0_3, %c0_4] : memref<1x256xf32, #tpu.memory_space<vmem>>, vector<1x256xf32>
    %5 = vector.broadcast %4 : vector<1x256xf32> to vector<256x256xf32>
    %6 = arith.addf %3, %5 : vector<256x256xf32>
    %7 = vector.extract_strided_slice %6 {offsets = [0, 0], sizes = [256, 128], strides = [1, 1]} : vector<256x256xf32> to vector<256x128xf32>
    %8 = math.tanh %7 : vector<256x128xf32>
    %9 = vector.extract_strided_slice %6 {offsets = [0, 128], sizes = [256, 128], strides = [1, 1]} : vector<256x256xf32> to vector<256x128xf32>
    %10 = arith.negf %9 : vector<256x128xf32>
    %11 = math.exp %10 : vector<256x128xf32>
    %cst_5 = arith.constant 1.000000e+00 : f32
    %12 = vector.broadcast %cst_5 : f32 to vector<256x128xf32>
    %13 = arith.addf %12, %11 : vector<256x128xf32>
    %14 = arith.divf %12, %13 : vector<256x128xf32>
    %15 = arith.mulf %8, %14 : vector<256x128xf32>
    %16 = arith.truncf %15 : vector<256x128xf32> to vector<256x128xbf16>
    %c0_6 = arith.constant 0 : index
    %c0_7 = arith.constant 0 : index
    %17 = vector.load %arg4[%c0_6, %c0_7] : memref<128x1xbf16, #tpu.memory_space<vmem>>, vector<128x1xbf16>
    %cst_8 = arith.constant dense<0.000000e+00> : vector<256x1xf32>
    %18 = tpu.matmul %16, %17, %cst_8 {dimension_numbers = #tpu.dot_dimension_numbers<[1], [0], [0], [1], [0, 0, 1, 1], [], []>} : vector<256x128xbf16>, vector<128x1xbf16>, vector<256x1xf32> -> vector<256x1xf32>
    %c0_9 = arith.constant 0 : index
    %c0_10 = arith.constant 0 : index
    %19 = vector.load %arg5[%c0_9, %c0_10] : memref<1x1xf32, #tpu.memory_space<vmem>>, vector<1x1xf32>
    %20 = vector.broadcast %19 : vector<1x1xf32> to vector<256x1xf32>
    %21 = arith.addf %18, %20 : vector<256x1xf32>
    %c0_11 = arith.constant 0 : index
    %c0_12 = arith.constant 0 : index
    %22 = vector.load %arg6[%c0_11, %c0_12] : memref<256x1xf32, #tpu.memory_space<vmem>>, vector<256x1xf32>
    tpu.vector_store %arg6[%c0_11, %c0_12], %21 {strides = array<i32>} : memref<256x1xf32, #tpu.memory_space<vmem>>, vector<256x1xf32>,
    return
  }
  func.func @transform_0(%arg0: i32) -> (i32, i32) {
    %c0_i32 = arith.constant 0 : i32
    %c0_i32_0 = arith.constant 0 : i32
    return %arg0, %c0_i32 : i32, i32
  }
  func.func @transform_1(%arg0: i32) -> (i32, i32) {
    %c0_i32 = arith.constant 0 : i32
    %c0_i32_0 = arith.constant 0 : i32
    %c0_i32_1 = arith.constant 0 : i32
    return %c0_i32, %c0_i32_0 : i32, i32
  }
  func.func @transform_2(%arg0: i32) -> (i32, i32) {
    %c0_i32 = arith.constant 0 : i32
    %c0_i32_0 = arith.constant 0 : i32
    %c0_i32_1 = arith.constant 0 : i32
    return %c0_i32, %c0_i32_0 : i32, i32
  }
  func.func @transform_3(%arg0: i32) -> (i32, i32) {
    %c0_i32 = arith.constant 0 : i32
    %c0_i32_0 = arith.constant 0 : i32
    %c0_i32_1 = arith.constant 0 : i32
    return %c0_i32, %c0_i32_0 : i32, i32
  }
  func.func @transform_4(%arg0: i32) -> (i32, i32) {
    %c0_i32 = arith.constant 0 : i32
    %c0_i32_0 = arith.constant 0 : i32
    %c0_i32_1 = arith.constant 0 : i32
    return %c0_i32, %c0_i32_0 : i32, i32
  }
  func.func @transform_5(%arg0: i32) -> (i32, i32) {
    %c0_i32 = arith.constant 0 : i32
    %c0_i32_0 = arith.constant 0 : i32
    return %arg0, %c0_i32 : i32, i32
  }
}

</mosaic_0001>

<llo_original>
// kernel: tpu_custom_call.1
$region0: #{tpu_custom_call.1}
  #allocation0 [shape = 'u32[]', space=smem, size = 0x4, offset = 0x4, fixed_abs, tag = 'smem constant byte address 0x4 - core index']
  #allocation1 [shape = 'u32[72,128]{1,0:T(1,128)}', space=vmem, size = 0x9000, scoped, tag = 'internal scratch']
  #allocation2 [shape = 'f32[1,1]{1,0:T(1,128)S(1)}', space=vmem, size = 0x200, scoped, tag = 'scoped memory for tpu_custom_call.1']
  %s0 = inlined_call_operand.hbm [shape: f32[300,128], index: 0, kind: input, shape index: {}]
  %s1 = inlined_call_operand.hbm [shape: bf16[128,256], index: 1, kind: input, shape index: {}]
  %s2 = inlined_call_operand.vmem [shape: f32[1,256], index: 2, kind: input, shape index: {}]
  %s3 = inlined_call_operand.vmem [shape: bf16[128,1], index: 3, kind: input, shape index: {}]
  %s4 = inlined_call_operand.<no memory space> [shape: f32[1,1], index: 4, kind: input, shape index: {}]
  %s5 = inlined_call_operand.vmem [shape: f32[300,1], index: 5, kind: output, shape index: {}]
  %s6 = sld [smem:[#allocation0]]
  $region109: #{tpu_custom_call.1} parent=0
    _
  %s8 = ssub.s32 1, %s6
  %s9 = scalar_select 0, %s8, %s6
  %v10 = vstv %s4
  %11 = vst [vmem:[#allocation2] sm:$0x1] %v10
  $region1: #{tpu_custom_call.1} parent=0
    #allocation3 [shape = 'u8[262144]{0}', space=vmem, size = 0x40000, scoped, tag = 'input window, operand 0']
    #allocation4 [shape = 's32[2]{0}', space=sflag, size = 0x8, scoped, tag = 'scoped memory for tpu_custom_call.1']
    #allocation5 [shape = 'u8[65536]{0}', space=vmem, size = 0x10000, scoped, tag = 'input window, operand 1, single buffered']
    #allocation6 [shape = 's32[1]{0}', space=sflag, size = 0x4, scoped, tag = 'scoped memory for tpu_custom_call.1']
    #allocation7 [shape = 'u8[262144]{0}', space=vmem, size = 0x40000, scoped, tag = 'output window, operand 0']
    %12 = vsyncpa [#allocation4], 0
    %s13 = scalar_lea.sflag [#allocation4], 1
    %14 = vsyncpa %s13, 0
    %15 = vsyncpa [#allocation6], 0
    loop: start=0, step=1, limit=4
    $region2: #{tpu_custom_call.1} parent=1 // loop_pre_header
      _
    $region3: #{tpu_custom_call.1} parent=1 // loop_header
      %s17 = sphi 0, %s21
      %p18 = scmp.ge.s32.totalorder %s17, 4
      %s27 = sphi 0, %s29
      %s30 = sphi 0, %s27
      %s31 = sphi 0, %s30
      %s47 = sphi 0, %s31
      %s51 = sphi 0, %s51
      %s53 = sphi 0, %s51
      %s54 = sphi 0, %s53
      %s68 = sphi 0, %s54
      %s72 = sphi 0, %s72
      %s74 = sphi 0, %s72
      %s75 = sphi 0, %s74
      %s89 = sphi 0, %s75
      %s93 = sphi 0, %s93
      %s95 = sphi 0, %s93
      %s96 = sphi 0, %s95
      %s110 = sphi 0, %s96
      %s114 = sphi 0, %s114
      %s116 = sphi 0, %s114
      %s117 = sphi 0, %s116
      %s131 = sphi 0, %s117
      %s137 = sphi 0, %s139
      %s140 = sphi 0, %s137
      %s141 = sphi 0, %s140
      %s157 = sphi 0, %s141
    $region4: #{tpu_custom_call.1} parent=1 // loop_header_branch
      %20 = sbr.rel (%p18) target = $region8
    $region5: #{tpu_custom_call.1} parent=1 // loop_body
      %s22 = ssub.s32 %s17, 1
      %s23 = ssub.s32 %s17, 2
      %s24 = sadd.s32 %s17, 1
      %s25 = ssub.s32 %s17, %s24
      %p26 = scmp.eq.s32.totalorder %s25, 0
      %s28 = sadd.s32 %s27, 1
      %s29 = scalar_select %p26, %s27, %s28
      %p32 = pneg %p26
      %p33 = scmp.eq.s32.totalorder %s17, 1
      %p34 = por %p32, %p33
      %p35 = scmp.ne.s32.totalorder %s27, %s30
      %p36 = scmp.eq.s32.totalorder %s17, 0
      %p37 = por %p35, %p36
      %p38 = scmp.ne.s32.totalorder %s27, %s30
      %p39 = scmp.eq.s32.totalorder %s22, 1
      %p40 = por %p38, %p39
      %p41 = scmp.ne.s32.totalorder %s30, %s31
      %p42 = scmp.eq.s32.totalorder %s22, 0
      %p43 = por %p41, %p42
      %p44 = scmp.ne.s32.totalorder %s30, %s31
      %p45 = scmp.eq.s32.totalorder %s23, 1
      %p46 = por %p44, %p45
      %p48 = scmp.ne.s32.totalorder %s31, %s47
      %p49 = scmp.eq.s32.totalorder %s23, 0
      %p50 = por %p48, %p49
      %s52 = sadd.s32 %s51, 1
      %p55 = scmp.eq.s32.totalorder %s17, 1
      %p56 = scmp.ne.s32.totalorder %s51, %s53
      %p57 = scmp.eq.s32.totalorder %s17, 0
      %p58 = por %p56, %p57
      %p59 = scmp.ne.s32.totalorder %s51, %s53
      %p60 = scmp.eq.s32.totalorder %s22, 1
      %p61 = por %p59, %p60
      %p62 = scmp.ne.s32.totalorder %s53, %s54
      %p63 = scmp.eq.s32.totalorder %s22, 0
      %p64 = por %p62, %p63
      %p65 = scmp.ne.s32.totalorder %s53, %s54
      %p66 = scmp.eq.s32.totalorder %s23, 1
      %p67 = por %p65, %p66
      %p69 = scmp.ne.s32.totalorder %s54, %s68
      %p70 = scmp.eq.s32.totalorder %s23, 0
      %p71 = por %p69, %p70
      %s73 = sadd.s32 %s72, 1
      %p76 = scmp.eq.s32.totalorder %s17, 1
      %p77 = scmp.ne.s32.totalorder %s72, %s74
      %p78 = scmp.eq.s32.totalorder %s17, 0
      %p79 = por %p77, %p78
      %p80 = scmp.ne.s32.totalorder %s72, %s74
      %p81 = scmp.eq.s32.totalorder %s22, 1
      %p82 = por %p80, %p81
      %p83 = scmp.ne.s32.totalorder %s74, %s75
      %p84 = scmp.eq.s32.totalorder %s22, 0
      %p85 = por %p83, %p84
      %p86 = scmp.ne.s32.totalorder %s74, %s75
      %p87 = scmp.eq.s32.totalorder %s23, 1
      %p88 = por %p86, %p87
      %p90 = scmp.ne.s32.totalorder %s75, %s89
      %p91 = scmp.eq.s32.totalorder %s23, 0
      %p92 = por %p90, %p91
      %s94 = sadd.s32 %s93, 1
      %p97 = scmp.eq.s32.totalorder %s17, 1
      %p98 = scmp.ne.s32.totalorder %s93, %s95
      %p99 = scmp.eq.s32.totalorder %s17, 0
      %p100 = por %p98, %p99
      %p101 = scmp.ne.s32.totalorder %s93, %s95
      %p102 = scmp.eq.s32.totalorder %s22, 1
      %p103 = por %p101, %p102
      %p104 = scmp.ne.s32.totalorder %s95, %s96
      %p105 = scmp.eq.s32.totalorder %s22, 0
      %p106 = por %p104, %p105
      %p107 = scmp.ne.s32.totalorder %s95, %s96
      %p108 = scmp.eq.s32.totalorder %s23, 1
      %p109 = por %p107, %p108
      %p111 = scmp.ne.s32.totalorder %s96, %s110
      %p112 = scmp.eq.s32.totalorder %s23, 0
      %p113 = por %p111, %p112
      %s115 = sadd.s32 %s114, 1
      %p118 = scmp.eq.s32.totalorder %s17, 1
      %p119 = scmp.ne.s32.totalorder %s114, %s116
      %p120 = scmp.eq.s32.totalorder %s17, 0
      %p121 = por %p119, %p120
      %p122 = scmp.ne.s32.totalorder %s114, %s116
      %p123 = scmp.eq.s32.totalorder %s22, 1
      %p124 = por %p122, %p123
      %p125 = scmp.ne.s32.totalorder %s116, %s117
      %p126 = scmp.eq.s32.totalorder %s22, 0
      %p127 = por %p125, %p126
      %p128 = scmp.ne.s32.totalorder %s116, %s117
      %p129 = scmp.eq.s32.totalorder %s23, 1
      %p130 = por %p128, %p129
      %p132 = scmp.ne.s32.totalorder %s117, %s131
      %p133 = scmp.eq.s32.totalorder %s23, 0
      %p134 = por %p132, %p133
      %s135 = ssub.s32 %s17, %s24
      %p136 = scmp.eq.s32.totalorder %s135, 0
      %s138 = sadd.s32 %s137, 1
      %s139 = scalar_select %p136, %s137, %s138
      %p142 = pneg %p136
      %p143 = scmp.eq.s32.totalorder %s17, 1
      %p144 = por %p142, %p143
      %p145 = scmp.ne.s32.totalorder %s137, %s140
      %p146 = scmp.eq.s32.totalorder %s17, 0
      %p147 = por %p145, %p146
      %p148 = scmp.ne.s32.totalorder %s137, %s140
      %p149 = scmp.eq.s32.totalorder %s22, 1
      %p150 = por %p148, %p149
      %p151 = scmp.ne.s32.totalorder %s140, %s141
      %p152 = scmp.eq.s32.totalorder %s22, 0
      %p153 = por %p151, %p152
      %p154 = scmp.ne.s32.totalorder %s140, %s141
      %p155 = scmp.eq.s32.totalorder %s23, 1
      %p156 = por %p154, %p155
      %p158 = scmp.ne.s32.totalorder %s141, %s157
      %p159 = scmp.eq.s32.totalorder %s23, 0
      %p160 = por %p158, %p159
      %p161 = scmp.le.s32.totalorder 1, %s17
      %p162 = scmp.lt.s32.totalorder %s17, 3
      %p163 = pnand %p161, %p162
      %p164 = pneg %p163
      // Predicated region
      $region9: #{tpu_custom_call.1} parent=5 // pred_check
        _
      $region10: #{tpu_custom_call.1} parent=5 // pred_check_branch
        %166 = sbr.rel (%p163) target = $region12
      $region11: #{tpu_custom_call.1} parent=5 // pred_region
        %s167 = ssub.s32 %s17, 1
        // Predicated region
        $region13: #{tpu_custom_call.1} parent=11 // pred_check
          %p168 = pneg %p64
        $region14: #{tpu_custom_call.1} parent=11 // pred_check_branch
          %170 = sbr.rel (%p168) target = $region16
        $region15: #{tpu_custom_call.1} parent=11 // pred_region
          %172 = vsyncadd [#allocation6], 0
          %s173 = sshll.u32 %s1, 4
          %s174 = int_to_ptr.hbm [resolvable:$true] %s173
          %s175 = sshll.u32 [#allocation5], 4
          %s176 = int_to_ptr.vmem [resolvable:$true] %s175
          %181 = dma.hbm_to_vmem [thread:$0]  %s174, 2048, %s176, [#allocation6], 128, 128, 8
        $region16: #{tpu_custom_call.1} parent=11 // pred_fallthru
          _
        // Predicated region
        $region17: #{tpu_custom_call.1} parent=11 // pred_check
          %p182 = pneg %p85
        $region18: #{tpu_custom_call.1} parent=11 // pred_check_branch
          %184 = sbr.rel (%p182) target = $region20
        $region19: #{tpu_custom_call.1} parent=11 // pred_region
          _
        $region20: #{tpu_custom_call.1} parent=11 // pred_fallthru
          _
        // Predicated region
        $region21: #{tpu_custom_call.1} parent=11 // pred_check
          %p185 = pneg %p106
        $region22: #{tpu_custom_call.1} parent=11 // pred_check_branch
          %187 = sbr.rel (%p185) target = $region24
        $region23: #{tpu_custom_call.1} parent=11 // pred_region
          _
        $region24: #{tpu_custom_call.1} parent=11 // pred_fallthru
          _
        // Predicated region
        $region25: #{tpu_custom_call.1} parent=11 // pred_check
          %p188 = pneg %p127
        $region26: #{tpu_custom_call.1} parent=11 // pred_check_branch
          %190 = sbr.rel (%p188) target = $region28
        $region27: #{tpu_custom_call.1} parent=11 // pred_region
          _
        $region28: #{tpu_custom_call.1} parent=11 // pred_fallthru
          _
      $region12: #{tpu_custom_call.1} parent=5 // pred_fallthru
        _
      %p191 = scmp.lt.s32.totalorder %s17, 2
      // Predicated region
      $region29: #{tpu_custom_call.1} parent=5 // pred_check
        %p192 = pneg %p191
      $region30: #{tpu_custom_call.1} parent=5 // pred_check_branch
        %194 = sbr.rel (%p192) target = $region32
      $region31: #{tpu_custom_call.1} parent=5 // pred_region
        // Predicated region
        $region33: #{tpu_custom_call.1} parent=31 // pred_check
          %p195 = pneg %p37
        $region34: #{tpu_custom_call.1} parent=31 // pred_check_branch
          %197 = sbr.rel (%p195) target = $region36
        $region35: #{tpu_custom_call.1} parent=31 // pred_region
          %s198 = sand.u32 %s27, 1
          %s199 = scalar_lea.sflag [#allocation4], %s198
          %s200 = sand.u32 %s27, 1
          %s201 = smul.addr %s200, 256
          %s202 = scalar_lea.vmem [#allocation3], %s201
          %s203 = smul.u32 32, %s17
          %s204 = ssub.s32 38, %s203
          %p205 = scmp.lt.s32.totalorder %s204, 32
          %s206 = scalar_select %p205, %s204, 32
          %s207 = smul.u32 8, %s206
          %s208 = ssub.s32 256, %s207
          %s209 = sshll.u32 %s208, 4
          %210 = vsyncadd %s199, %s209
          %p211 = scmp.ne.s32.totalorder 0, %s207
          %s212 = smul.addr %s203, 8
          %s213 = scalar_lea.hbm %s0, %s212
          %s214 = smul.u32 8, %s206
          %s215 = sshll.u32 %s213, 4
          %s216 = int_to_ptr.hbm [resolvable:$true] %s215
          %s217 = sshll.u32 %s202, 4
          %s218 = int_to_ptr.vmem [resolvable:$true] %s217
          %s219 = sshll.u32 %s214, 4
          %223 = dma.hbm_to_vmem [thread:$0]  (%p211), %s216, %s219, %s218, %s199, 128, 128, 8
        $region36: #{tpu_custom_call.1} parent=31 // pred_fallthru
          _
      $region32: #{tpu_custom_call.1} parent=5 // pred_fallthru
        _
      %p224 = scmp.le.s32.totalorder 1, %s17
      %p225 = scmp.lt.s32.totalorder %s17, 3
      %p226 = pnand %p224, %p225
      %p227 = pneg %p226
      // Predicated region
      $region37: #{tpu_custom_call.1} parent=5 // pred_check
        _
      $region38: #{tpu_custom_call.1} parent=5 // pred_check_branch
        %229 = sbr.rel (%p226) target = $region40
      $region39: #{tpu_custom_call.1} parent=5 // pred_region
        %s230 = ssub.s32 %s17, 1
        %s231 = sand.u32 %s30, 1
        %s232 = scalar_lea.sflag [#allocation4], %s231
        %s233 = sand.u32 %s30, 1
        %s234 = smul.addr %s233, 256
        %s235 = scalar_lea.vmem [#allocation3], %s234
        // Predicated region
        $region41: #{tpu_custom_call.1} parent=39 // pred_check
          %p236 = pneg %p43
        $region42: #{tpu_custom_call.1} parent=39 // pred_check_branch
          %238 = sbr.rel (%p236) target = $region44
        $region43: #{tpu_custom_call.1} parent=39 // pred_region
          %240 = dma.done %s232, 4096
        $region44: #{tpu_custom_call.1} parent=39 // pred_fallthru
          _
        // Predicated region
        $region45: #{tpu_custom_call.1} parent=39 // pred_check
          %p241 = pneg %p64
        $region46: #{tpu_custom_call.1} parent=39 // pred_check_branch
          %243 = sbr.rel (%p241) target = $region48
        $region47: #{tpu_custom_call.1} parent=39 // pred_region
          %245 = dma.done [#allocation6], 2048
        $region48: #{tpu_custom_call.1} parent=39 // pred_fallthru
          _
        %s246 = sand.u32 %s30, 1
        %s247 = scalar_lea.sflag [#allocation4], %s246
        %s248 = sand.u32 %s30, 1
        %s249 = smul.addr %s248, 256
        %s250 = scalar_lea.vmem [#allocation3], %s249
        %p251 = pneg %p43
        %p252 = pneg %p40
        %p253 = pneg %p64
        %p254 = pneg %p61
        %p255 = pneg %p85
        %p256 = pneg %p82
        %p257 = pneg %p106
        %p258 = pneg %p103
        %p259 = pneg %p127
        %p260 = pneg %p124
        %p261 = pneg %p153
        %p262 = pneg %p150
        %s263 = sand.u32 %s140, 1
        %s264 = sand.u32 %s140, 1
        %s265 = smul.addr %s264, 256
        %s266 = scalar_lea.vmem [#allocation7], %s265
        %s267 = smul.u32 32, %s22
        %s268 = ssub.s32 38, %s267
        %p269 = scmp.lt.s32.totalorder %s268, 32
        %s270 = scalar_select %p269, %s268, 32
        %s271 = smul.u32 8, %s270
        %s272 = smul.u32 32, %s22
        %s273 = ssub.s32 38, %s272
        %p274 = scmp.lt.s32.totalorder %s273, 32
        %s275 = scalar_select %p274, %s273, 32
        %s276 = smul.u32 8, %s275
        %v277 = vld [vmem:[%s235] sm:$0xff]
        %v278 = vld [vmem:[%s235 + $0x8] sm:$0xff]
        %v279 = vld [vmem:[%s235 + $0x10] sm:$0xff]
        %v280 = vld [vmem:[%s235 + $0x18] sm:$0xff]
        %v281 = vld [vmem:[%s235 + $0x20] sm:$0xff]
        %v282 = vld [vmem:[%s235 + $0x28] sm:$0xff]
        %v283 = vld [vmem:[%s235 + $0x30] sm:$0xff]
        %v284 = vld [vmem:[%s235 + $0x38] sm:$0xff]
        %v285 = vld [vmem:[%s235 + $0x40] sm:$0xff]
        %v286 = vld [vmem:[%s235 + $0x48] sm:$0xff]
        %v287 = vld [vmem:[%s235 + $0x50] sm:$0xff]
        %v288 = vld [vmem:[%s235 + $0x58] sm:$0xff]
        %v289 = vld [vmem:[%s235 + $0x60] sm:$0xff]
        %v290 = vld [vmem:[%s235 + $0x68] sm:$0xff]
        %v291 = vld [vmem:[%s235 + $0x70] sm:$0xff]
        %v292 = vld [vmem:[%s235 + $0x78] sm:$0xff]
        %v293 = vld [vmem:[%s235 + $0x80] sm:$0xff]
        %v294 = vld [vmem:[%s235 + $0x88] sm:$0xff]
        %v295 = vld [vmem:[%s235 + $0x90] sm:$0xff]
        %v296 = vld [vmem:[%s235 + $0x98] sm:$0xff]
        %v297 = vld [vmem:[%s235 + $0xa0] sm:$0xff]
        %v298 = vld [vmem:[%s235 + $0xa8] sm:$0xff]
        %v299 = vld [vmem:[%s235 + $0xb0] sm:$0xff]
        %v300 = vld [vmem:[%s235 + $0xb8] sm:$0xff]
        %v301 = vld [vmem:[%s235 + $0xc0] sm:$0xff]
        %v302 = vld [vmem:[%s235 + $0xc8] sm:$0xff]
        %v303 = vld [vmem:[%s235 + $0xd0] sm:$0xff]
        %v304 = vld [vmem:[%s235 + $0xd8] sm:$0xff]
        %v305 = vld [vmem:[%s235 + $0xe0] sm:$0xff]
        %v306 = vld [vmem:[%s235 + $0xe8] sm:$0xff]
        %v307 = vld [vmem:[%s235 + $0xf0] sm:$0xff]
        %v308 = vld [vmem:[%s235 + $0xf8] sm:$0xff]
        %v309 = vpack.c.bf16 %v278, %v277
        %v310 = vpack.c.bf16 %v280, %v279
        %v311 = vpack.c.bf16 %v282, %v281
        %v312 = vpack.c.bf16 %v284, %v283
        %v313 = vpack.c.bf16 %v286, %v285
        %v314 = vpack.c.bf16 %v288, %v287
        %v315 = vpack.c.bf16 %v290, %v289
        %v316 = vpack.c.bf16 %v292, %v291
        %v317 = vpack.c.bf16 %v294, %v293
        %v318 = vpack.c.bf16 %v296, %v295
        %v319 = vpack.c.bf16 %v298, %v297
        %v320 = vpack.c.bf16 %v300, %v299
        %v321 = vpack.c.bf16 %v302, %v301
        %v322 = vpack.c.bf16 %v304, %v303
        %v323 = vpack.c.bf16 %v306, %v305
        %v324 = vpack.c.bf16 %v308, %v307
        %v325 = vld [vmem:[#allocation5] sm:$0xff]
        %v326 = vld [vmem:[#allocation5 + $0x8] sm:$0xff]
        %v327 = vld [vmem:[#allocation5 + $0x10] sm:$0xff]
        %v328 = vld [vmem:[#allocation5 + $0x18] sm:$0xff]
        %v329 = vld [vmem:[#allocation5 + $0x20] sm:$0xff]
        %v330 = vld [vmem:[#allocation5 + $0x28] sm:$0xff]
        %v331 = vld [vmem:[#allocation5 + $0x30] sm:$0xff]
        %v332 = vld [vmem:[#allocation5 + $0x38] sm:$0xff]
        %v333 = vld [vmem:[#allocation5 + $0x40] sm:$0xff]
        %v334 = vld [vmem:[#allocation5 + $0x48] sm:$0xff]
        %v335 = vld [vmem:[#allocation5 + $0x50] sm:$0xff]
        %v336 = vld [vmem:[#allocation5 + $0x58] sm:$0xff]
        %v337 = vld [vmem:[#allocation5 + $0x60] sm:$0xff]
        %v338 = vld [vmem:[#allocation5 + $0x68] sm:$0xff]
        %v339 = vld [vmem:[#allocation5 + $0x70] sm:$0xff]
        %v340 = vld [vmem:[#allocation5 + $0x78] sm:$0xff]
        %v341 = vld [vmem:[%s2] sm:$0x3]
        %v343 = vperm.slane %v341, 0
        %v344 = vperm.slane %v341, 1
        %v363 = vunpack.c.l.b16 %v325
        %v364 = vunpack.c.h.b16 %v325
        %v365 = vunpack.c.l.b16 %v326
        %v366 = vunpack.c.h.b16 %v326
        %v367 = vunpack.c.l.b16 %v327
        %v368 = vunpack.c.h.b16 %v327
        %v369 = vunpack.c.l.b16 %v328
        %v370 = vunpack.c.h.b16 %v328
        %v371 = vunpack.c.l.b16 %v329
        %v372 = vunpack.c.h.b16 %v329
        %v373 = vunpack.c.l.b16 %v330
        %v374 = vunpack.c.h.b16 %v330
        %v375 = vunpack.c.l.b16 %v331
        %v376 = vunpack.c.h.b16 %v331
        %v377 = vunpack.c.l.b16 %v332
        %v378 = vunpack.c.h.b16 %v332
        %v379 = vunpack.c.l.b16 %v333
        %v380 = vunpack.c.h.b16 %v333
        %v381 = vunpack.c.l.b16 %v334
        %v382 = vunpack.c.h.b16 %v334
        %v383 = vunpack.c.l.b16 %v335
        %v384 = vunpack.c.h.b16 %v335
        %v385 = vunpack.c.l.b16 %v336
        %v386 = vunpack.c.h.b16 %v336
        %v387 = vunpack.c.l.b16 %v337
        %v388 = vunpack.c.h.b16 %v337
        %v389 = vunpack.c.l.b16 %v338
        %v390 = vunpack.c.h.b16 %v338
        %v391 = vunpack.c.l.b16 %v339
        %v392 = vunpack.c.h.b16 %v339
        %v393 = vunpack.c.l.b16 %v340
        %v394 = vunpack.c.h.b16 %v340
        %v395 = vpack.c.b16 %v365, %v363
        %v396 = vpack.c.b16 %v366, %v364
        %v397 = vpack.c.b16 %v369, %v367
        %v398 = vpack.c.b16 %v370, %v368
        %v399 = vpack.c.b16 %v373, %v371
        %v400 = vpack.c.b16 %v374, %v372
        %v401 = vpack.c.b16 %v377, %v375
        %v402 = vpack.c.b16 %v378, %v376
        %v403 = vpack.c.b16 %v381, %v379
        %v404 = vpack.c.b16 %v382, %v380
        %v405 = vpack.c.b16 %v385, %v383
        %v406 = vpack.c.b16 %v386, %v384
        %v407 = vpack.c.b16 %v389, %v387
        %v408 = vpack.c.b16 %v390, %v388
        %v409 = vpack.c.b16 %v393, %v391
        %v410 = vpack.c.b16 %v394, %v392
        %427 = vmatpush.bf16.msra.mxu0 %v409
        %428 = vmatpush.bf16.msra.mxu0 %v407
        %429 = vmatpush.bf16.msra.mxu0 %v405
        %430 = vmatpush.bf16.msra.mxu0 %v403
        %431 = vmatpush.bf16.msra.mxu0 %v401
        %432 = vmatpush.bf16.msra.mxu0 %v399
        %433 = vmatpush.bf16.msra.mxu0 %v397
        %434 = vmatpush.bf16.msra.mxu0 %v395
        %435 = vmatmul.bf16.gmra.mxu0 %v309
        %v436 = vpop.f32.mrf.mxu0
        %v437 = vadd.f32 %v343, %v436
        %v438 = vpop.f32.mrf.mxu0
        %v439 = vadd.f32 %v343, %v438
        %440 = vmatmul.bf16.gmra.mxu0 %v310
        %v441 = vpop.f32.mrf.mxu0
        %v442 = vadd.f32 %v343, %v441
        %v443 = vpop.f32.mrf.mxu0
        %v444 = vadd.f32 %v343, %v443
        %445 = vmatmul.bf16.gmra.mxu0 %v311
        %v446 = vpop.f32.mrf.mxu0
        %v447 = vadd.f32 %v343, %v446
        %v448 = vpop.f32.mrf.mxu0
        %v449 = vadd.f32 %v343, %v448
        %450 = vmatmul.bf16.gmra.mxu0 %v312
        %v451 = vpop.f32.mrf.mxu0
        %v452 = vadd.f32 %v343, %v451
        %v453 = vpop.f32.mrf.mxu0
        %v454 = vadd.f32 %v343, %v453
        %455 = vmatmul.bf16.gmra.mxu0 %v313
        %v456 = vpop.f32.mrf.mxu0
        %v457 = vadd.f32 %v343, %v456
        %v458 = vpop.f32.mrf.mxu0
        %v459 = vadd.f32 %v343, %v458
        %460 = vmatmul.bf16.gmra.mxu0 %v314
        %v461 = vpop.f32.mrf.mxu0
        %v462 = vadd.f32 %v343, %v461
        %v463 = vpop.f32.mrf.mxu0
        %v464 = vadd.f32 %v343, %v463
        %465 = vmatmul.bf16.gmra.mxu0 %v315
        %v466 = vpop.f32.mrf.mxu0
        %v467 = vadd.f32 %v343, %v466
        %v468 = vpop.f32.mrf.mxu0
        %v469 = vadd.f32 %v343, %v468
        %470 = vmatmul.bf16.gmra.mxu0 %v316
        %v471 = vpop.f32.mrf.mxu0
        %v472 = vadd.f32 %v343, %v471
        %v473 = vpop.f32.mrf.mxu0
        %v474 = vadd.f32 %v343, %v473
        %475 = vmatmul.bf16.gmra.mxu0 %v317
        %v476 = vpop.f32.mrf.mxu0
        %v477 = vadd.f32 %v343, %v476
        %v478 = vpop.f32.mrf.mxu0
        %v479 = vadd.f32 %v343, %v478
        %480 = vmatmul.bf16.gmra.mxu0 %v318
        %v481 = vpop.f32.mrf.mxu0
        %v482 = vadd.f32 %v343, %v481
        %v483 = vpop.f32.mrf.mxu0
        %v484 = vadd.f32 %v343, %v483
        %485 = vmatmul.bf16.gmra.mxu0 %v319
        %v486 = vpop.f32.mrf.mxu0
        %v487 = vadd.f32 %v343, %v486
        %v488 = vpop.f32.mrf.mxu0
        %v489 = vadd.f32 %v343, %v488
        %490 = vmatmul.bf16.gmra.mxu0 %v320
        %v491 = vpop.f32.mrf.mxu0
        %v492 = vadd.f32 %v343, %v491
        %v493 = vpop.f32.mrf.mxu0
        %v494 = vadd.f32 %v343, %v493
        %495 = vmatmul.bf16.gmra.mxu0 %v321
        %v496 = vpop.f32.mrf.mxu0
        %v497 = vadd.f32 %v343, %v496
        %v498 = vpop.f32.mrf.mxu0
        %v499 = vadd.f32 %v343, %v498
        %500 = vmatmul.bf16.gmra.mxu0 %v322
        %v501 = vpop.f32.mrf.mxu0
        %v502 = vadd.f32 %v343, %v501
        %v503 = vpop.f32.mrf.mxu0
        %v504 = vadd.f32 %v343, %v503
        %505 = vmatmul.bf16.gmra.mxu0 %v323
        %v506 = vpop.f32.mrf.mxu0
        %v507 = vadd.f32 %v343, %v506
        %v508 = vpop.f32.mrf.mxu0
        %v509 = vadd.f32 %v343, %v508
        %510 = vmatmul.bf16.gmra.mxu0 %v324
        %v511 = vpop.f32.mrf.mxu0
        %v512 = vadd.f32 %v343, %v511
        %v513 = vpop.f32.mrf.mxu0
        %v514 = vadd.f32 %v343, %v513
        %515 = vdwg.mxu0
        %516 = vmatpush.bf16.msra.mxu0 %v410
        %517 = vmatpush.bf16.msra.mxu0 %v408
        %518 = vmatpush.bf16.msra.mxu0 %v406
        %519 = vmatpush.bf16.msra.mxu0 %v404
        %520 = vmatpush.bf16.msra.mxu0 %v402
        %521 = vmatpush.bf16.msra.mxu0 %v400
        %522 = vmatpush.bf16.msra.mxu0 %v398
        %523 = vmatpush.bf16.msra.mxu0 %v396
        %524 = vmatmul.bf16.gmra.mxu0 %v309
        %v525 = vpop.f32.mrf.mxu0
        %v526 = vadd.f32 %v344, %v525
        %v527 = vpop.f32.mrf.mxu0
        %v528 = vadd.f32 %v344, %v527
        %529 = vmatmul.bf16.gmra.mxu0 %v310
        %v530 = vpop.f32.mrf.mxu0
        %v531 = vadd.f32 %v344, %v530
        %v532 = vpop.f32.mrf.mxu0
        %v533 = vadd.f32 %v344, %v532
        %534 = vmatmul.bf16.gmra.mxu0 %v311
        %v535 = vpop.f32.mrf.mxu0
        %v536 = vadd.f32 %v344, %v535
        %v537 = vpop.f32.mrf.mxu0
        %v538 = vadd.f32 %v344, %v537
        %539 = vmatmul.bf16.gmra.mxu0 %v312
        %v540 = vpop.f32.mrf.mxu0
        %v541 = vadd.f32 %v344, %v540
        %v542 = vpop.f32.mrf.mxu0
        %v543 = vadd.f32 %v344, %v542
        %544 = vmatmul.bf16.gmra.mxu0 %v313
        %v545 = vpop.f32.mrf.mxu0
        %v546 = vadd.f32 %v344, %v545
        %v547 = vpop.f32.mrf.mxu0
        %v548 = vadd.f32 %v344, %v547
        %549 = vmatmul.bf16.gmra.mxu0 %v314
        %v550 = vpop.f32.mrf.mxu0
        %v551 = vadd.f32 %v344, %v550
        %v552 = vpop.f32.mrf.mxu0
        %v553 = vadd.f32 %v344, %v552
        %554 = vmatmul.bf16.gmra.mxu0 %v315
        %v555 = vpop.f32.mrf.mxu0
        %v556 = vadd.f32 %v344, %v555
        %v557 = vpop.f32.mrf.mxu0
        %v558 = vadd.f32 %v344, %v557
        %559 = vmatmul.bf16.gmra.mxu0 %v316
        %v560 = vpop.f32.mrf.mxu0
        %v561 = vadd.f32 %v344, %v560
        %v562 = vpop.f32.mrf.mxu0
        %v563 = vadd.f32 %v344, %v562
        %564 = vmatmul.bf16.gmra.mxu0 %v317
        %v565 = vpop.f32.mrf.mxu0
        %v566 = vadd.f32 %v344, %v565
        %v567 = vpop.f32.mrf.mxu0
        %v568 = vadd.f32 %v344, %v567
        %569 = vmatmul.bf16.gmra.mxu0 %v318
        %v570 = vpop.f32.mrf.mxu0
        %v571 = vadd.f32 %v344, %v570
        %v572 = vpop.f32.mrf.mxu0
        %v573 = vadd.f32 %v344, %v572
        %574 = vmatmul.bf16.gmra.mxu0 %v319
        %v575 = vpop.f32.mrf.mxu0
        %v576 = vadd.f32 %v344, %v575
        %v577 = vpop.f32.mrf.mxu0
        %v578 = vadd.f32 %v344, %v577
        %579 = vmatmul.bf16.gmra.mxu0 %v320
        %v580 = vpop.f32.mrf.mxu0
        %v581 = vadd.f32 %v344, %v580
        %v582 = vpop.f32.mrf.mxu0
        %v583 = vadd.f32 %v344, %v582
        %584 = vmatmul.bf16.gmra.mxu0 %v321
        %v585 = vpop.f32.mrf.mxu0
        %v586 = vadd.f32 %v344, %v585
        %v587 = vpop.f32.mrf.mxu0
        %v588 = vadd.f32 %v344, %v587
        %589 = vmatmul.bf16.gmra.mxu0 %v322
        %v590 = vpop.f32.mrf.mxu0
        %v591 = vadd.f32 %v344, %v590
        %v592 = vpop.f32.mrf.mxu0
        %v593 = vadd.f32 %v344, %v592
        %594 = vmatmul.bf16.gmra.mxu0 %v323
        %v595 = vpop.f32.mrf.mxu0
        %v596 = vadd.f32 %v344, %v595
        %v597 = vpop.f32.mrf.mxu0
        %v598 = vadd.f32 %v344, %v597
        %599 = vmatmul.bf16.gmra.mxu0 %v324
        %v600 = vpop.f32.mrf.mxu0
        %v601 = vadd.f32 %v344, %v600
        %v602 = vpop.f32.mrf.mxu0
        %v603 = vadd.f32 %v344, %v602
        %604 = vdwg.mxu0
        %v605 = vtanh.pop %v437
        %v606 = vtanh.pop %v439
        %v607 = vtanh.pop %v442
        %v608 = vtanh.pop %v444
        %v609 = vtanh.pop %v447
        %v610 = vtanh.pop %v449
        %v611 = vtanh.pop %v452
        %v612 = vtanh.pop %v454
        %v613 = vtanh.pop %v457
        %v614 = vtanh.pop %v459
        %v615 = vtanh.pop %v462
        %v616 = vtanh.pop %v464
        %v617 = vtanh.pop %v467
        %v618 = vtanh.pop %v469
        %v619 = vtanh.pop %v472
        %v620 = vtanh.pop %v474
        %v621 = vtanh.pop %v477
        %v622 = vtanh.pop %v479
        %v623 = vtanh.pop %v482
        %v624 = vtanh.pop %v484
        %v625 = vtanh.pop %v487
        %v626 = vtanh.pop %v489
        %v627 = vtanh.pop %v492
        %v628 = vtanh.pop %v494
        %v629 = vtanh.pop %v497
        %v630 = vtanh.pop %v499
        %v631 = vtanh.pop %v502
        %v632 = vtanh.pop %v504
        %v633 = vtanh.pop %v507
        %v634 = vtanh.pop %v509
        %v635 = vtanh.pop %v512
        %v636 = vtanh.pop %v514
        %v637 = vxor.u32 %v526, 2147483648
        %v638 = vxor.u32 %v528, 2147483648
        %v639 = vxor.u32 %v531, 2147483648
        %v640 = vxor.u32 %v533, 2147483648
        %v641 = vxor.u32 %v536, 2147483648
        %v642 = vxor.u32 %v538, 2147483648
        %v643 = vxor.u32 %v541, 2147483648
        %v644 = vxor.u32 %v543, 2147483648
        %v645 = vxor.u32 %v546, 2147483648
        %v646 = vxor.u32 %v548, 2147483648
        %v647 = vxor.u32 %v551, 2147483648
        %v648 = vxor.u32 %v553, 2147483648
        %v649 = vxor.u32 %v556, 2147483648
        %v650 = vxor.u32 %v558, 2147483648
        %v651 = vxor.u32 %v561, 2147483648
        %v652 = vxor.u32 %v563, 2147483648
        %v653 = vxor.u32 %v566, 2147483648
        %v654 = vxor.u32 %v568, 2147483648
        %v655 = vxor.u32 %v571, 2147483648
        %v656 = vxor.u32 %v573, 2147483648
        %v657 = vxor.u32 %v576, 2147483648
        %v658 = vxor.u32 %v578, 2147483648
        %v659 = vxor.u32 %v581, 2147483648
        %v660 = vxor.u32 %v583, 2147483648
        %v661 = vxor.u32 %v586, 2147483648
        %v662 = vxor.u32 %v588, 2147483648
        %v663 = vxor.u32 %v591, 2147483648
        %v664 = vxor.u32 %v593, 2147483648
        %v665 = vxor.u32 %v596, 2147483648
        %v666 = vxor.u32 %v598, 2147483648
        %v667 = vxor.u32 %v601, 2147483648
        %v668 = vxor.u32 %v603, 2147483648
        %v669 = vmul.f32 %v637, 1.442695
        %v670 = vpow.pop %v669
        %v671 = vmul.f32 %v638, 1.442695
        %v672 = vpow.pop %v671
        %v673 = vmul.f32 %v639, 1.442695
        %v674 = vpow.pop %v673
        %v675 = vmul.f32 %v640, 1.442695
        %v676 = vpow.pop %v675
        %v677 = vmul.f32 %v641, 1.442695
        %v678 = vpow.pop %v677
        %v679 = vmul.f32 %v642, 1.442695
        %v680 = vpow.pop %v679
        %v681 = vmul.f32 %v643, 1.442695
        %v682 = vpow.pop %v681
        %v683 = vmul.f32 %v644, 1.442695
        %v684 = vpow.pop %v683
        %v685 = vmul.f32 %v645, 1.442695
        %v686 = vpow.pop %v685
        %v687 = vmul.f32 %v646, 1.442695
        %v688 = vpow.pop %v687
        %v689 = vmul.f32 %v647, 1.442695
        %v690 = vpow.pop %v689
        %v691 = vmul.f32 %v648, 1.442695
        %v692 = vpow.pop %v691
        %v693 = vmul.f32 %v649, 1.442695
        %v694 = vpow.pop %v693
        %v695 = vmul.f32 %v650, 1.442695
        %v696 = vpow.pop %v695
        %v697 = vmul.f32 %v651, 1.442695
        %v698 = vpow.pop %v697
        %v699 = vmul.f32 %v652, 1.442695
        %v700 = vpow.pop %v699
        %v701 = vmul.f32 %v653, 1.442695
        %v702 = vpow.pop %v701
        %v703 = vmul.f32 %v654, 1.442695
        %v704 = vpow.pop %v703
        %v705 = vmul.f32 %v655, 1.442695
        %v706 = vpow.pop %v705
        %v707 = vmul.f32 %v656, 1.442695
        %v708 = vpow.pop %v707
        %v709 = vmul.f32 %v657, 1.442695
        %v710 = vpow.pop %v709
        %v711 = vmul.f32 %v658, 1.442695
        %v712 = vpow.pop %v711
        %v713 = vmul.f32 %v659, 1.442695
        %v714 = vpow.pop %v713
        %v715 = vmul.f32 %v660, 1.442695
        %v716 = vpow.pop %v715
        %v717 = vmul.f32 %v661, 1.442695
        %v718 = vpow.pop %v717
        %v719 = vmul.f32 %v662, 1.442695
        %v720 = vpow.pop %v719
        %v721 = vmul.f32 %v663, 1.442695
        %v722 = vpow.pop %v721
        %v723 = vmul.f32 %v664, 1.442695
        %v724 = vpow.pop %v723
        %v725 = vmul.f32 %v665, 1.442695
        %v726 = vpow.pop %v725
        %v727 = vmul.f32 %v666, 1.442695
        %v728 = vpow.pop %v727
        %v729 = vmul.f32 %v667, 1.442695
        %v730 = vpow.pop %v729
        %v731 = vmul.f32 %v668, 1.442695
        %v732 = vpow.pop %v731
        %v733 = vadd.f32 %v670, 1.0
        %v734 = vadd.f32 %v672, 1.0
        %v735 = vadd.f32 %v674, 1.0
        %v736 = vadd.f32 %v676, 1.0
        %v737 = vadd.f32 %v678, 1.0
        %v738 = vadd.f32 %v680, 1.0
        %v739 = vadd.f32 %v682, 1.0
        %v740 = vadd.f32 %v684, 1.0
        %v741 = vadd.f32 %v686, 1.0
        %v742 = vadd.f32 %v688, 1.0
        %v743 = vadd.f32 %v690, 1.0
        %v744 = vadd.f32 %v692, 1.0
        %v745 = vadd.f32 %v694, 1.0
        %v746 = vadd.f32 %v696, 1.0
        %v747 = vadd.f32 %v698, 1.0
        %v748 = vadd.f32 %v700, 1.0
        %v749 = vadd.f32 %v702, 1.0
        %v750 = vadd.f32 %v704, 1.0
        %v751 = vadd.f32 %v706, 1.0
        %v752 = vadd.f32 %v708, 1.0
        %v753 = vadd.f32 %v710, 1.0
        %v754 = vadd.f32 %v712, 1.0
        %v755 = vadd.f32 %v714, 1.0
        %v756 = vadd.f32 %v716, 1.0
        %v757 = vadd.f32 %v718, 1.0
        %v758 = vadd.f32 %v720, 1.0
        %v759 = vadd.f32 %v722, 1.0
        %v760 = vadd.f32 %v724, 1.0
        %v761 = vadd.f32 %v726, 1.0
        %v762 = vadd.f32 %v728, 1.0
        %v763 = vadd.f32 %v730, 1.0
        %v764 = vadd.f32 %v732, 1.0
        %v765 = vrcp.pop %v733
        %v766 = vmul.f32 %v733, %v765
        %v767 = vsub.f32 1.0, %v766
        %v768 = vmul.f32 %v765, %v767
        %v769 = vadd.f32 %v765, %v768
        %vm770 = vweird.f32 %v733
        %vm771 = vweird.f32 %v765
        %vm772 = vmor %vm770, %vm771
        %v773 = vsel %vm772, %v765, %v769
        %v774 = vand.u32 2147483647, %v733
        %vm775 = vcmp.eq.f32.partialorder %v774, 8.507059e+37
        %v776 = vand.u32 %v733, 2147483648
        %v777 = vor.u32 1.1754944e-38, %v776
        %v778 = vsel %vm775, %v777, %v773
        %v779 = vmul.f32 1.0, %v778
        %v780 = vrcp.pop %v734
        %v781 = vmul.f32 %v734, %v780
        %v782 = vsub.f32 1.0, %v781
        %v783 = vmul.f32 %v780, %v782
        %v784 = vadd.f32 %v780, %v783
        %vm785 = vweird.f32 %v734
        %vm786 = vweird.f32 %v780
        %vm787 = vmor %vm785, %vm786
        %v788 = vsel %vm787, %v780, %v784
        %v789 = vand.u32 2147483647, %v734
        %vm790 = vcmp.eq.f32.partialorder %v789, 8.507059e+37
        %v791 = vand.u32 %v734, 2147483648
        %v792 = vor.u32 1.1754944e-38, %v791
        %v793 = vsel %vm790, %v792, %v788
        %v794 = vmul.f32 1.0, %v793
        %v795 = vrcp.pop %v735
        %v796 = vmul.f32 %v735, %v795
        %v797 = vsub.f32 1.0, %v796
        %v798 = vmul.f32 %v795, %v797
        %v799 = vadd.f32 %v795, %v798
        %vm800 = vweird.f32 %v735
        %vm801 = vweird.f32 %v795
        %vm802 = vmor %vm800, %vm801
        %v803 = vsel %vm802, %v795, %v799
        %v804 = vand.u32 2147483647, %v735
        %vm805 = vcmp.eq.f32.partialorder %v804, 8.507059e+37
        %v806 = vand.u32 %v735, 2147483648
        %v807 = vor.u32 1.1754944e-38, %v806
        %v808 = vsel %vm805, %v807, %v803
        %v809 = vmul.f32 1.0, %v808
        %v810 = vrcp.pop %v736
        %v811 = vmul.f32 %v736, %v810
        %v812 = vsub.f32 1.0, %v811
        %v813 = vmul.f32 %v810, %v812
        %v814 = vadd.f32 %v810, %v813
        %vm815 = vweird.f32 %v736
        %vm816 = vweird.f32 %v810
        %vm817 = vmor %vm815, %vm816
        %v818 = vsel %vm817, %v810, %v814
        %v819 = vand.u32 2147483647, %v736
        %vm820 = vcmp.eq.f32.partialorder %v819, 8.507059e+37
        %v821 = vand.u32 %v736, 2147483648
        %v822 = vor.u32 1.1754944e-38, %v821
        %v823 = vsel %vm820, %v822, %v818
        %v824 = vmul.f32 1.0, %v823
        %v825 = vrcp.pop %v737
        %v826 = vmul.f32 %v737, %v825
        %v827 = vsub.f32 1.0, %v826
        %v828 = vmul.f32 %v825, %v827
        %v829 = vadd.f32 %v825, %v828
        %vm830 = vweird.f32 %v737
        %vm831 = vweird.f32 %v825
        %vm832 = vmor %vm830, %vm831
        %v833 = vsel %vm832, %v825, %v829
        %v834 = vand.u32 2147483647, %v737
        %vm835 = vcmp.eq.f32.partialorder %v834, 8.507059e+37
        %v836 = vand.u32 %v737, 2147483648
        %v837 = vor.u32 1.1754944e-38, %v836
        %v838 = vsel %vm835, %v837, %v833
        %v839 = vmul.f32 1.0, %v838
        %v840 = vrcp.pop %v738
        %v841 = vmul.f32 %v738, %v840
        %v842 = vsub.f32 1.0, %v841
        %v843 = vmul.f32 %v840, %v842
        %v844 = vadd.f32 %v840, %v843
        %vm845 = vweird.f32 %v738
        %vm846 = vweird.f32 %v840
        %vm847 = vmor %vm845, %vm846
        %v848 = vsel %vm847, %v840, %v844
        %v849 = vand.u32 2147483647, %v738
        %vm850 = vcmp.eq.f32.partialorder %v849, 8.507059e+37
        %v851 = vand.u32 %v738, 2147483648
        %v852 = vor.u32 1.1754944e-38, %v851
        %v853 = vsel %vm850, %v852, %v848
        %v854 = vmul.f32 1.0, %v853
        %v855 = vrcp.pop %v739
        %v856 = vmul.f32 %v739, %v855
        %v857 = vsub.f32 1.0, %v856
        %v858 = vmul.f32 %v855, %v857
        %v859 = vadd.f32 %v855, %v858
        %vm860 = vweird.f32 %v739
        %vm861 = vweird.f32 %v855
        %vm862 = vmor %vm860, %vm861
        %v863 = vsel %vm862, %v855, %v859
        %v864 = vand.u32 2147483647, %v739
        %vm865 = vcmp.eq.f32.partialorder %v864, 8.507059e+37
        %v866 = vand.u32 %v739, 2147483648
        %v867 = vor.u32 1.1754944e-38, %v866
        %v868 = vsel %vm865, %v867, %v863
        %v869 = vmul.f32 1.0, %v868
        %v870 = vrcp.pop %v740
        %v871 = vmul.f32 %v740, %v870
        %v872 = vsub.f32 1.0, %v871
        %v873 = vmul.f32 %v870, %v872
        %v874 = vadd.f32 %v870, %v873
        %vm875 = vweird.f32 %v740
        %vm876 = vweird.f32 %v870
        %vm877 = vmor %vm875, %vm876
        %v878 = vsel %vm877, %v870, %v874
        %v879 = vand.u32 2147483647, %v740
        %vm880 = vcmp.eq.f32.partialorder %v879, 8.507059e+37
        %v881 = vand.u32 %v740, 2147483648
        %v882 = vor.u32 1.1754944e-38, %v881
        %v883 = vsel %vm880, %v882, %v878
        %v884 = vmul.f32 1.0, %v883
        %v885 = vrcp.pop %v741
        %v886 = vmul.f32 %v741, %v885
        %v887 = vsub.f32 1.0, %v886
        %v888 = vmul.f32 %v885, %v887
        %v889 = vadd.f32 %v885, %v888
        %vm890 = vweird.f32 %v741
        %vm891 = vweird.f32 %v885
        %vm892 = vmor %vm890, %vm891
        %v893 = vsel %vm892, %v885, %v889
        %v894 = vand.u32 2147483647, %v741
        %vm895 = vcmp.eq.f32.partialorder %v894, 8.507059e+37
        %v896 = vand.u32 %v741, 2147483648
        %v897 = vor.u32 1.1754944e-38, %v896
        %v898 = vsel %vm895, %v897, %v893
        %v899 = vmul.f32 1.0, %v898
        %v900 = vrcp.pop %v742
        %v901 = vmul.f32 %v742, %v900
        %v902 = vsub.f32 1.0, %v901
        %v903 = vmul.f32 %v900, %v902
        %v904 = vadd.f32 %v900, %v903
        %vm905 = vweird.f32 %v742
        %vm906 = vweird.f32 %v900
        %vm907 = vmor %vm905, %vm906
        %v908 = vsel %vm907, %v900, %v904
        %v909 = vand.u32 2147483647, %v742
        %vm910 = vcmp.eq.f32.partialorder %v909, 8.507059e+37
        %v911 = vand.u32 %v742, 2147483648
        %v912 = vor.u32 1.1754944e-38, %v911
        %v913 = vsel %vm910, %v912, %v908
        %v914 = vmul.f32 1.0, %v913
        %v915 = vrcp.pop %v743
        %v916 = vmul.f32 %v743, %v915
        %v917 = vsub.f32 1.0, %v916
        %v918 = vmul.f32 %v915, %v917
        %v919 = vadd.f32 %v915, %v918
        %vm920 = vweird.f32 %v743
        %vm921 = vweird.f32 %v915
        %vm922 = vmor %vm920, %vm921
        %v923 = vsel %vm922, %v915, %v919
        %v924 = vand.u32 2147483647, %v743
        %vm925 = vcmp.eq.f32.partialorder %v924, 8.507059e+37
        %v926 = vand.u32 %v743, 2147483648
        %v927 = vor.u32 1.1754944e-38, %v926
        %v928 = vsel %vm925, %v927, %v923
        %v929 = vmul.f32 1.0, %v928
        %v930 = vrcp.pop %v744
        %v931 = vmul.f32 %v744, %v930
        %v932 = vsub.f32 1.0, %v931
        %v933 = vmul.f32 %v930, %v932
        %v934 = vadd.f32 %v930, %v933
        %vm935 = vweird.f32 %v744
        %vm936 = vweird.f32 %v930
        %vm937 = vmor %vm935, %vm936
        %v938 = vsel %vm937, %v930, %v934
        %v939 = vand.u32 2147483647, %v744
        %vm940 = vcmp.eq.f32.partialorder %v939, 8.507059e+37
        %v941 = vand.u32 %v744, 2147483648
        %v942 = vor.u32 1.1754944e-38, %v941
        %v943 = vsel %vm940, %v942, %v938
        %v944 = vmul.f32 1.0, %v943
        %v945 = vrcp.pop %v745
        %v946 = vmul.f32 %v745, %v945
        %v947 = vsub.f32 1.0, %v946
        %v948 = vmul.f32 %v945, %v947
        %v949 = vadd.f32 %v945, %v948
        %vm950 = vweird.f32 %v745
        %vm951 = vweird.f32 %v945
        %vm952 = vmor %vm950, %vm951
        %v953 = vsel %vm952, %v945, %v949
        %v954 = vand.u32 2147483647, %v745
        %vm955 = vcmp.eq.f32.partialorder %v954, 8.507059e+37
        %v956 = vand.u32 %v745, 2147483648
        %v957 = vor.u32 1.1754944e-38, %v956
        %v958 = vsel %vm955, %v957, %v953
        %v959 = vmul.f32 1.0, %v958
        %v960 = vrcp.pop %v746
        %v961 = vmul.f32 %v746, %v960
        %v962 = vsub.f32 1.0, %v961
        %v963 = vmul.f32 %v960, %v962
        %v964 = vadd.f32 %v960, %v963
        %vm965 = vweird.f32 %v746
        %vm966 = vweird.f32 %v960
        %vm967 = vmor %vm965, %vm966
        %v968 = vsel %vm967, %v960, %v964
        %v969 = vand.u32 2147483647, %v746
        %vm970 = vcmp.eq.f32.partialorder %v969, 8.507059e+37
        %v971 = vand.u32 %v746, 2147483648
        %v972 = vor.u32 1.1754944e-38, %v971
        %v973 = vsel %vm970, %v972, %v968
        %v974 = vmul.f32 1.0, %v973
        %v975 = vrcp.pop %v747
        %v976 = vmul.f32 %v747, %v975
        %v977 = vsub.f32 1.0, %v976
        %v978 = vmul.f32 %v975, %v977
        %v979 = vadd.f32 %v975, %v978
        %vm980 = vweird.f32 %v747
        %vm981 = vweird.f32 %v975
        %vm982 = vmor %vm980, %vm981
        %v983 = vsel %vm982, %v975, %v979
        %v984 = vand.u32 2147483647, %v747
        %vm985 = vcmp.eq.f32.partialorder %v984, 8.507059e+37
        %v986 = vand.u32 %v747, 2147483648
        %v987 = vor.u32 1.1754944e-38, %v986
        %v988 = vsel %vm985, %v987, %v983
        %v989 = vmul.f32 1.0, %v988
        %v990 = vrcp.pop %v748
        %v991 = vmul.f32 %v748, %v990
        %v992 = vsub.f32 1.0, %v991
        %v993 = vmul.f32 %v990, %v992
        %v994 = vadd.f32 %v990, %v993
        %vm995 = vweird.f32 %v748
        %vm996 = vweird.f32 %v990
        %vm997 = vmor %vm995, %vm996
        %v998 = vsel %vm997, %v990, %v994
        %v999 = vand.u32 2147483647, %v748
        %vm1000 = vcmp.eq.f32.partialorder %v999, 8.507059e+37
        %v1001 = vand.u32 %v748, 2147483648
        %v1002 = vor.u32 1.1754944e-38, %v1001
        %v1003 = vsel %vm1000, %v1002, %v998
        %v1004 = vmul.f32 1.0, %v1003
        %v1005 = vrcp.pop %v749
        %v1006 = vmul.f32 %v749, %v1005
        %v1007 = vsub.f32 1.0, %v1006
        %v1008 = vmul.f32 %v1005, %v1007
        %v1009 = vadd.f32 %v1005, %v1008
        %vm1010 = vweird.f32 %v749
        %vm1011 = vweird.f32 %v1005
        %vm1012 = vmor %vm1010, %vm1011
        %v1013 = vsel %vm1012, %v1005, %v1009
        %v1014 = vand.u32 2147483647, %v749
        %vm1015 = vcmp.eq.f32.partialorder %v1014, 8.507059e+37
        %v1016 = vand.u32 %v749, 2147483648
        %v1017 = vor.u32 1.1754944e-38, %v1016
        %v1018 = vsel %vm1015, %v1017, %v1013
        %v1019 = vmul.f32 1.0, %v1018
        %v1020 = vrcp.pop %v750
        %v1021 = vmul.f32 %v750, %v1020
        %v1022 = vsub.f32 1.0, %v1021
        %v1023 = vmul.f32 %v1020, %v1022
        %v1024 = vadd.f32 %v1020, %v1023
        %vm1025 = vweird.f32 %v750
        %vm1026 = vweird.f32 %v1020
        %vm1027 = vmor %vm1025, %vm1026
        %v1028 = vsel %vm1027, %v1020, %v1024
        %v1029 = vand.u32 2147483647, %v750
        %vm1030 = vcmp.eq.f32.partialorder %v1029, 8.507059e+37
        %v1031 = vand.u32 %v750, 2147483648
        %v1032 = vor.u32 1.1754944e-38, %v1031
        %v1033 = vsel %vm1030, %v1032, %v1028
        %v1034 = vmul.f32 1.0, %v1033
        %v1035 = vrcp.pop %v751
        %v1036 = vmul.f32 %v751, %v1035
        %v1037 = vsub.f32 1.0, %v1036
        %v1038 = vmul.f32 %v1035, %v1037
        %v1039 = vadd.f32 %v1035, %v1038
        %vm1040 = vweird.f32 %v751
        %vm1041 = vweird.f32 %v1035
        %vm1042 = vmor %vm1040, %vm1041
        %v1043 = vsel %vm1042, %v1035, %v1039
        %v1044 = vand.u32 2147483647, %v751
        %vm1045 = vcmp.eq.f32.partialorder %v1044, 8.507059e+37
        %v1046 = vand.u32 %v751, 2147483648
        %v1047 = vor.u32 1.1754944e-38, %v1046
        %v1048 = vsel %vm1045, %v1047, %v1043
        %v1049 = vmul.f32 1.0, %v1048
        %v1050 = vrcp.pop %v752
        %v1051 = vmul.f32 %v752, %v1050
        %v1052 = vsub.f32 1.0, %v1051
        %v1053 = vmul.f32 %v1050, %v1052
        %v1054 = vadd.f32 %v1050, %v1053
        %vm1055 = vweird.f32 %v752
        %vm1056 = vweird.f32 %v1050
        %vm1057 = vmor %vm1055, %vm1056
        %v1058 = vsel %vm1057, %v1050, %v1054
        %v1059 = vand.u32 2147483647, %v752
        %vm1060 = vcmp.eq.f32.partialorder %v1059, 8.507059e+37
        %v1061 = vand.u32 %v752, 2147483648
        %v1062 = vor.u32 1.1754944e-38, %v1061
        %v1063 = vsel %vm1060, %v1062, %v1058
        %v1064 = vmul.f32 1.0, %v1063
        %v1065 = vrcp.pop %v753
        %v1066 = vmul.f32 %v753, %v1065
        %v1067 = vsub.f32 1.0, %v1066
        %v1068 = vmul.f32 %v1065, %v1067
        %v1069 = vadd.f32 %v1065, %v1068
        %vm1070 = vweird.f32 %v753
        %vm1071 = vweird.f32 %v1065
        %vm1072 = vmor %vm1070, %vm1071
        %v1073 = vsel %vm1072, %v1065, %v1069
        %v1074 = vand.u32 2147483647, %v753
        %vm1075 = vcmp.eq.f32.partialorder %v1074, 8.507059e+37
        %v1076 = vand.u32 %v753, 2147483648
        %v1077 = vor.u32 1.1754944e-38, %v1076
        %v1078 = vsel %vm1075, %v1077, %v1073
        %v1079 = vmul.f32 1.0, %v1078
        %v1080 = vrcp.pop %v754
        %v1081 = vmul.f32 %v754, %v1080
        %v1082 = vsub.f32 1.0, %v1081
        %v1083 = vmul.f32 %v1080, %v1082
        %v1084 = vadd.f32 %v1080, %v1083
        %vm1085 = vweird.f32 %v754
        %vm1086 = vweird.f32 %v1080
        %vm1087 = vmor %vm1085, %vm1086
        %v1088 = vsel %vm1087, %v1080, %v1084
        %v1089 = vand.u32 2147483647, %v754
        %vm1090 = vcmp.eq.f32.partialorder %v1089, 8.507059e+37
        %v1091 = vand.u32 %v754, 2147483648
        %v1092 = vor.u32 1.1754944e-38, %v1091
        %v1093 = vsel %vm1090, %v1092, %v1088
        %v1094 = vmul.f32 1.0, %v1093
        %v1095 = vrcp.pop %v755
        %v1096 = vmul.f32 %v755, %v1095
        %v1097 = vsub.f32 1.0, %v1096
        %v1098 = vmul.f32 %v1095, %v1097
        %v1099 = vadd.f32 %v1095, %v1098
        %vm1100 = vweird.f32 %v755
        %vm1101 = vweird.f32 %v1095
        %vm1102 = vmor %vm1100, %vm1101
        %v1103 = vsel %vm1102, %v1095, %v1099
        %v1104 = vand.u32 2147483647, %v755
        %vm1105 = vcmp.eq.f32.partialorder %v1104, 8.507059e+37
        %v1106 = vand.u32 %v755, 2147483648
        %v1107 = vor.u32 1.1754944e-38, %v1106
        %v1108 = vsel %vm1105, %v1107, %v1103
        %v1109 = vmul.f32 1.0, %v1108
        %v1110 = vrcp.pop %v756
        %v1111 = vmul.f32 %v756, %v1110
        %v1112 = vsub.f32 1.0, %v1111
        %v1113 = vmul.f32 %v1110, %v1112
        %v1114 = vadd.f32 %v1110, %v1113
        %vm1115 = vweird.f32 %v756
        %vm1116 = vweird.f32 %v1110
        %vm1117 = vmor %vm1115, %vm1116
        %v1118 = vsel %vm1117, %v1110, %v1114
        %v1119 = vand.u32 2147483647, %v756
        %vm1120 = vcmp.eq.f32.partialorder %v1119, 8.507059e+37
        %v1121 = vand.u32 %v756, 2147483648
        %v1122 = vor.u32 1.1754944e-38, %v1121
        %v1123 = vsel %vm1120, %v1122, %v1118
        %v1124 = vmul.f32 1.0, %v1123
        %v1125 = vrcp.pop %v757
        %v1126 = vmul.f32 %v757, %v1125
        %v1127 = vsub.f32 1.0, %v1126
        %v1128 = vmul.f32 %v1125, %v1127
        %v1129 = vadd.f32 %v1125, %v1128
        %vm1130 = vweird.f32 %v757
        %vm1131 = vweird.f32 %v1125
        %vm1132 = vmor %vm1130, %vm1131
        %v1133 = vsel %vm1132, %v1125, %v1129
        %v1134 = vand.u32 2147483647, %v757
        %vm1135 = vcmp.eq.f32.partialorder %v1134, 8.507059e+37
        %v1136 = vand.u32 %v757, 2147483648
        %v1137 = vor.u32 1.1754944e-38, %v1136
        %v1138 = vsel %vm1135, %v1137, %v1133
        %v1139 = vmul.f32 1.0, %v1138
        %v1140 = vrcp.pop %v758
        %v1141 = vmul.f32 %v758, %v1140
        %v1142 = vsub.f32 1.0, %v1141
        %v1143 = vmul.f32 %v1140, %v1142
        %v1144 = vadd.f32 %v1140, %v1143
        %vm1145 = vweird.f32 %v758
        %vm1146 = vweird.f32 %v1140
        %vm1147 = vmor %vm1145, %vm1146
        %v1148 = vsel %vm1147, %v1140, %v1144
        %v1149 = vand.u32 2147483647, %v758
        %vm1150 = vcmp.eq.f32.partialorder %v1149, 8.507059e+37
        %v1151 = vand.u32 %v758, 2147483648
        %v1152 = vor.u32 1.1754944e-38, %v1151
        %v1153 = vsel %vm1150, %v1152, %v1148
        %v1154 = vmul.f32 1.0, %v1153
        %v1155 = vrcp.pop %v759
        %v1156 = vmul.f32 %v759, %v1155
        %v1157 = vsub.f32 1.0, %v1156
        %v1158 = vmul.f32 %v1155, %v1157
        %v1159 = vadd.f32 %v1155, %v1158
        %vm1160 = vweird.f32 %v759
        %vm1161 = vweird.f32 %v1155
        %vm1162 = vmor %vm1160, %vm1161
        %v1163 = vsel %vm1162, %v1155, %v1159
        %v1164 = vand.u32 2147483647, %v759
        %vm1165 = vcmp.eq.f32.partialorder %v1164, 8.507059e+37
        %v1166 = vand.u32 %v759, 2147483648
        %v1167 = vor.u32 1.1754944e-38, %v1166
        %v1168 = vsel %vm1165, %v1167, %v1163
        %v1169 = vmul.f32 1.0, %v1168
        %v1170 = vrcp.pop %v760
        %v1171 = vmul.f32 %v760, %v1170
        %v1172 = vsub.f32 1.0, %v1171
        %v1173 = vmul.f32 %v1170, %v1172
        %v1174 = vadd.f32 %v1170, %v1173
        %vm1175 = vweird.f32 %v760
        %vm1176 = vweird.f32 %v1170
        %vm1177 = vmor %vm1175, %vm1176
        %v1178 = vsel %vm1177, %v1170, %v1174
        %v1179 = vand.u32 2147483647, %v760
        %vm1180 = vcmp.eq.f32.partialorder %v1179, 8.507059e+37
        %v1181 = vand.u32 %v760, 2147483648
        %v1182 = vor.u32 1.1754944e-38, %v1181
        %v1183 = vsel %vm1180, %v1182, %v1178
        %v1184 = vmul.f32 1.0, %v1183
        %v1185 = vrcp.pop %v761
        %v1186 = vmul.f32 %v761, %v1185
        %v1187 = vsub.f32 1.0, %v1186
        %v1188 = vmul.f32 %v1185, %v1187
        %v1189 = vadd.f32 %v1185, %v1188
        %vm1190 = vweird.f32 %v761
        %vm1191 = vweird.f32 %v1185
        %vm1192 = vmor %vm1190, %vm1191
        %v1193 = vsel %vm1192, %v1185, %v1189
        %v1194 = vand.u32 2147483647, %v761
        %vm1195 = vcmp.eq.f32.partialorder %v1194, 8.507059e+37
        %v1196 = vand.u32 %v761, 2147483648
        %v1197 = vor.u32 1.1754944e-38, %v1196
        %v1198 = vsel %vm1195, %v1197, %v1193
        %v1199 = vmul.f32 1.0, %v1198
        %v1200 = vrcp.pop %v762
        %v1201 = vmul.f32 %v762, %v1200
        %v1202 = vsub.f32 1.0, %v1201
        %v1203 = vmul.f32 %v1200, %v1202
        %v1204 = vadd.f32 %v1200, %v1203
        %vm1205 = vweird.f32 %v762
        %vm1206 = vweird.f32 %v1200
        %vm1207 = vmor %vm1205, %vm1206
        %v1208 = vsel %vm1207, %v1200, %v1204
        %v1209 = vand.u32 2147483647, %v762
        %vm1210 = vcmp.eq.f32.partialorder %v1209, 8.507059e+37
        %v1211 = vand.u32 %v762, 2147483648
        %v1212 = vor.u32 1.1754944e-38, %v1211
        %v1213 = vsel %vm1210, %v1212, %v1208
        %v1214 = vmul.f32 1.0, %v1213
        %v1215 = vrcp.pop %v763
        %v1216 = vmul.f32 %v763, %v1215
        %v1217 = vsub.f32 1.0, %v1216
        %v1218 = vmul.f32 %v1215, %v1217
        %v1219 = vadd.f32 %v1215, %v1218
        %vm1220 = vweird.f32 %v763
        %vm1221 = vweird.f32 %v1215
        %vm1222 = vmor %vm1220, %vm1221
        %v1223 = vsel %vm1222, %v1215, %v1219
        %v1224 = vand.u32 2147483647, %v763
        %vm1225 = vcmp.eq.f32.partialorder %v1224, 8.507059e+37
        %v1226 = vand.u32 %v763, 2147483648
        %v1227 = vor.u32 1.1754944e-38, %v1226
        %v1228 = vsel %vm1225, %v1227, %v1223
        %v1229 = vmul.f32 1.0, %v1228
        %v1230 = vrcp.pop %v764
        %v1231 = vmul.f32 %v764, %v1230
        %v1232 = vsub.f32 1.0, %v1231
        %v1233 = vmul.f32 %v1230, %v1232
        %v1234 = vadd.f32 %v1230, %v1233
        %vm1235 = vweird.f32 %v764
        %vm1236 = vweird.f32 %v1230
        %vm1237 = vmor %vm1235, %vm1236
        %v1238 = vsel %vm1237, %v1230, %v1234
        %v1239 = vand.u32 2147483647, %v764
        %vm1240 = vcmp.eq.f32.partialorder %v1239, 8.507059e+37
        %v1241 = vand.u32 %v764, 2147483648
        %v1242 = vor.u32 1.1754944e-38, %v1241
        %v1243 = vsel %vm1240, %v1242, %v1238
        %v1244 = vmul.f32 1.0, %v1243
        %v1245 = vmul.f32 %v605, %v779
        %v1246 = vmul.f32 %v606, %v794
        %v1247 = vmul.f32 %v607, %v809
        %v1248 = vmul.f32 %v608, %v824
        %v1249 = vmul.f32 %v609, %v839
        %v1250 = vmul.f32 %v610, %v854
        %v1251 = vmul.f32 %v611, %v869
        %v1252 = vmul.f32 %v612, %v884
        %v1253 = vmul.f32 %v613, %v899
        %v1254 = vmul.f32 %v614, %v914
        %v1255 = vmul.f32 %v615, %v929
        %v1256 = vmul.f32 %v616, %v944
        %v1257 = vmul.f32 %v617, %v959
        %v1258 = vmul.f32 %v618, %v974
        %v1259 = vmul.f32 %v619, %v989
        %v1260 = vmul.f32 %v620, %v1004
        %v1261 = vmul.f32 %v621, %v1019
        %v1262 = vmul.f32 %v622, %v1034
        %v1263 = vmul.f32 %v623, %v1049
        %v1264 = vmul.f32 %v624, %v1064
        %v1265 = vmul.f32 %v625, %v1079
        %v1266 = vmul.f32 %v626, %v1094
        %v1267 = vmul.f32 %v627, %v1109
        %v1268 = vmul.f32 %v628, %v1124
        %v1269 = vmul.f32 %v629, %v1139
        %v1270 = vmul.f32 %v630, %v1154
        %v1271 = vmul.f32 %v631, %v1169
        %v1272 = vmul.f32 %v632, %v1184
        %v1273 = vmul.f32 %v633, %v1199
        %v1274 = vmul.f32 %v634, %v1214
        %v1275 = vmul.f32 %v635, %v1229
        %v1276 = vmul.f32 %v636, %v1244
        %v1277 = vpack.c.bf16 %v1246, %v1245
        %v1278 = vpack.c.bf16 %v1248, %v1247
        %v1279 = vpack.c.bf16 %v1250, %v1249
        %v1280 = vpack.c.bf16 %v1252, %v1251
        %v1281 = vpack.c.bf16 %v1254, %v1253
        %v1282 = vpack.c.bf16 %v1256, %v1255
        %v1283 = vpack.c.bf16 %v1258, %v1257
        %v1284 = vpack.c.bf16 %v1260, %v1259
        %v1285 = vpack.c.bf16 %v1262, %v1261
        %v1286 = vpack.c.bf16 %v1264, %v1263
        %v1287 = vpack.c.bf16 %v1266, %v1265
        %v1288 = vpack.c.bf16 %v1268, %v1267
        %v1289 = vpack.c.bf16 %v1270, %v1269
        %v1290 = vpack.c.bf16 %v1272, %v1271
        %v1291 = vpack.c.bf16 %v1274, %v1273
        %v1292 = vpack.c.bf16 %v1276, %v1275
        %v1293 = vld [vmem:[%s3] sm:$0xf]
        %v1294 = vld [vmem:[%s3 + $0x4] sm:$0xf]
        %v1295 = vld [vmem:[%s3 + $0x8] sm:$0xf]
        %v1296 = vld [vmem:[%s3 + $0xc] sm:$0xf]
        %v1297 = vld [vmem:[%s3 + $0x10] sm:$0xf]
        %v1298 = vld [vmem:[%s3 + $0x14] sm:$0xf]
        %v1299 = vld [vmem:[%s3 + $0x18] sm:$0xf]
        %v1300 = vld [vmem:[%s3 + $0x1c] sm:$0xf]
        %v1301 = vld [vmem:[%s3 + $0x20] sm:$0xf]
        %v1302 = vld [vmem:[%s3 + $0x24] sm:$0xf]
        %v1303 = vld [vmem:[%s3 + $0x28] sm:$0xf]
        %v1304 = vld [vmem:[%s3 + $0x2c] sm:$0xf]
        %v1305 = vld [vmem:[%s3 + $0x30] sm:$0xf]
        %v1306 = vld [vmem:[%s3 + $0x34] sm:$0xf]
        %v1307 = vld [vmem:[%s3 + $0x38] sm:$0xf]
        %v1308 = vld [vmem:[%s3 + $0x3c] sm:$0xf]
        %v1309 = vld [vmem:[#allocation2] sm:$0x1]
        %v1311 = vperm.slane %v1309, 0
        %v1329 = vunpack.c.l.b16 %v1293
        %v1330 = vunpack.c.l.b16 %v1294
        %v1331 = vunpack.c.l.b16 %v1295
        %v1332 = vunpack.c.l.b16 %v1296
        %v1333 = vunpack.c.l.b16 %v1297
        %v1334 = vunpack.c.l.b16 %v1298
        %v1335 = vunpack.c.l.b16 %v1299
        %v1336 = vunpack.c.l.b16 %v1300
        %v1337 = vunpack.c.l.b16 %v1301
        %v1338 = vunpack.c.l.b16 %v1302
        %v1339 = vunpack.c.l.b16 %v1303
        %v1340 = vunpack.c.l.b16 %v1304
        %v1341 = vunpack.c.l.b16 %v1305
        %v1342 = vunpack.c.l.b16 %v1306
        %v1343 = vunpack.c.l.b16 %v1307
        %v1344 = vunpack.c.l.b16 %v1308
        %v1345 = vpack.c.b16 %v1330, %v1329
        %v1346 = vpack.c.b16 %v1332, %v1331
        %v1347 = vpack.c.b16 %v1334, %v1333
        %v1348 = vpack.c.b16 %v1336, %v1335
        %v1349 = vpack.c.b16 %v1338, %v1337
        %v1350 = vpack.c.b16 %v1340, %v1339
        %v1351 = vpack.c.b16 %v1342, %v1341
        %v1352 = vpack.c.b16 %v1344, %v1343
        %1361 = vmatpush.bf16.msra.mxu0 %v1352
        %1362 = vmatpush.bf16.msra.mxu0 %v1351
        %1363 = vmatpush.bf16.msra.mxu0 %v1350
        %1364 = vmatpush.bf16.msra.mxu0 %v1349
        %1365 = vmatpush.bf16.msra.mxu0 %v1348
        %1366 = vmatpush.bf16.msra.mxu0 %v1347
        %1367 = vmatpush.bf16.msra.mxu0 %v1346
        %1368 = vmatpush.bf16.msra.mxu0 %v1345
        %1369 = vmatmul.bf16.gmra.mxu0 %v1277
        %v1370 = vpop.f32.mrf.mxu0
        %v1371 = vadd.f32 %v1311, %v1370
        %v1372 = vpop.f32.mrf.mxu0
        %v1373 = vadd.f32 %v1311, %v1372
        %1374 = vmatmul.bf16.gmra.mxu0 %v1278
        %v1375 = vpop.f32.mrf.mxu0
        %v1376 = vadd.f32 %v1311, %v1375
        %v1377 = vpop.f32.mrf.mxu0
        %v1378 = vadd.f32 %v1311, %v1377
        %1379 = vmatmul.bf16.gmra.mxu0 %v1279
        %v1380 = vpop.f32.mrf.mxu0
        %v1381 = vadd.f32 %v1311, %v1380
        %v1382 = vpop.f32.mrf.mxu0
        %v1383 = vadd.f32 %v1311, %v1382
        %1384 = vmatmul.bf16.gmra.mxu0 %v1280
        %v1385 = vpop.f32.mrf.mxu0
        %v1386 = vadd.f32 %v1311, %v1385
        %v1387 = vpop.f32.mrf.mxu0
        %v1388 = vadd.f32 %v1311, %v1387
        %1389 = vmatmul.bf16.gmra.mxu0 %v1281
        %v1390 = vpop.f32.mrf.mxu0
        %v1391 = vadd.f32 %v1311, %v1390
        %v1392 = vpop.f32.mrf.mxu0
        %v1393 = vadd.f32 %v1311, %v1392
        %1394 = vmatmul.bf16.gmra.mxu0 %v1282
        %v1395 = vpop.f32.mrf.mxu0
        %v1396 = vadd.f32 %v1311, %v1395
        %v1397 = vpop.f32.mrf.mxu0
        %v1398 = vadd.f32 %v1311, %v1397
        %1399 = vmatmul.bf16.gmra.mxu0 %v1283
        %v1400 = vpop.f32.mrf.mxu0
        %v1401 = vadd.f32 %v1311, %v1400
        %v1402 = vpop.f32.mrf.mxu0
        %v1403 = vadd.f32 %v1311, %v1402
        %1404 = vmatmul.bf16.gmra.mxu0 %v1284
        %v1405 = vpop.f32.mrf.mxu0
        %v1406 = vadd.f32 %v1311, %v1405
        %v1407 = vpop.f32.mrf.mxu0
        %v1408 = vadd.f32 %v1311, %v1407
        %1409 = vmatmul.bf16.gmra.mxu0 %v1285
        %v1410 = vpop.f32.mrf.mxu0
        %v1411 = vadd.f32 %v1311, %v1410
        %v1412 = vpop.f32.mrf.mxu0
        %v1413 = vadd.f32 %v1311, %v1412
        %1414 = vmatmul.bf16.gmra.mxu0 %v1286
        %v1415 = vpop.f32.mrf.mxu0
        %v1416 = vadd.f32 %v1311, %v1415
        %v1417 = vpop.f32.mrf.mxu0
        %v1418 = vadd.f32 %v1311, %v1417
        %1419 = vmatmul.bf16.gmra.mxu0 %v1287
        %v1420 = vpop.f32.mrf.mxu0
        %v1421 = vadd.f32 %v1311, %v1420
        %v1422 = vpop.f32.mrf.mxu0
        %v1423 = vadd.f32 %v1311, %v1422
        %1424 = vmatmul.bf16.gmra.mxu0 %v1288
        %v1425 = vpop.f32.mrf.mxu0
        %v1426 = vadd.f32 %v1311, %v1425
        %v1427 = vpop.f32.mrf.mxu0
        %v1428 = vadd.f32 %v1311, %v1427
        %1429 = vmatmul.bf16.gmra.mxu0 %v1289
        %v1430 = vpop.f32.mrf.mxu0
        %v1431 = vadd.f32 %v1311, %v1430
        %v1432 = vpop.f32.mrf.mxu0
        %v1433 = vadd.f32 %v1311, %v1432
        %1434 = vmatmul.bf16.gmra.mxu0 %v1290
        %v1435 = vpop.f32.mrf.mxu0
        %v1436 = vadd.f32 %v1311, %v1435
        %v1437 = vpop.f32.mrf.mxu0
        %v1438 = vadd.f32 %v1311, %v1437
        %1439 = vmatmul.bf16.gmra.mxu0 %v1291
        %v1440 = vpop.f32.mrf.mxu0
        %v1441 = vadd.f32 %v1311, %v1440
        %v1442 = vpop.f32.mrf.mxu0
        %v1443 = vadd.f32 %v1311, %v1442
        %1444 = vmatmul.bf16.gmra.mxu0 %v1292
        %v1445 = vpop.f32.mrf.mxu0
        %v1446 = vadd.f32 %v1311, %v1445
        %v1447 = vpop.f32.mrf.mxu0
        %v1448 = vadd.f32 %v1311, %v1447
        %1449 = vdwg.mxu0
        %vm1450 = vcmask 7168
        %1451 = vst.msk [vmem:[%s266] sm:$0xff] %vm1450, %v1371
        %1452 = vst.msk [vmem:[%s266 + $0x8] sm:$0xff] %vm1450, %v1373
        %1453 = vst.msk [vmem:[%s266 + $0x10] sm:$0xff] %vm1450, %v1376
        %1454 = vst.msk [vmem:[%s266 + $0x18] sm:$0xff] %vm1450, %v1378
        %1455 = vst.msk [vmem:[%s266 + $0x20] sm:$0xff] %vm1450, %v1381
        %1456 = vst.msk [vmem:[%s266 + $0x28] sm:$0xff] %vm1450, %v1383
        %1457 = vst.msk [vmem:[%s266 + $0x30] sm:$0xff] %vm1450, %v1386
        %1458 = vst.msk [vmem:[%s266 + $0x38] sm:$0xff] %vm1450, %v1388
        %1459 = vst.msk [vmem:[%s266 + $0x40] sm:$0xff] %vm1450, %v1391
        %1460 = vst.msk [vmem:[%s266 + $0x48] sm:$0xff] %vm1450, %v1393
        %1461 = vst.msk [vmem:[%s266 + $0x50] sm:$0xff] %vm1450, %v1396
        %1462 = vst.msk [vmem:[%s266 + $0x58] sm:$0xff] %vm1450, %v1398
        %1463 = vst.msk [vmem:[%s266 + $0x60] sm:$0xff] %vm1450, %v1401
        %1464 = vst.msk [vmem:[%s266 + $0x68] sm:$0xff] %vm1450, %v1403
        %1465 = vst.msk [vmem:[%s266 + $0x70] sm:$0xff] %vm1450, %v1406
        %1466 = vst.msk [vmem:[%s266 + $0x78] sm:$0xff] %vm1450, %v1408
        %1467 = vst.msk [vmem:[%s266 + $0x80] sm:$0xff] %vm1450, %v1411
        %1468 = vst.msk [vmem:[%s266 + $0x88] sm:$0xff] %vm1450, %v1413
        %1469 = vst.msk [vmem:[%s266 + $0x90] sm:$0xff] %vm1450, %v1416
        %1470 = vst.msk [vmem:[%s266 + $0x98] sm:$0xff] %vm1450, %v1418
        %1471 = vst.msk [vmem:[%s266 + $0xa0] sm:$0xff] %vm1450, %v1421
        %1472 = vst.msk [vmem:[%s266 + $0xa8] sm:$0xff] %vm1450, %v1423
        %1473 = vst.msk [vmem:[%s266 + $0xb0] sm:$0xff] %vm1450, %v1426
        %1474 = vst.msk [vmem:[%s266 + $0xb8] sm:$0xff] %vm1450, %v1428
        %1475 = vst.msk [vmem:[%s266 + $0xc0] sm:$0xff] %vm1450, %v1431
        %1476 = vst.msk [vmem:[%s266 + $0xc8] sm:$0xff] %vm1450, %v1433
        %1477 = vst.msk [vmem:[%s266 + $0xd0] sm:$0xff] %vm1450, %v1436
        %1478 = vst.msk [vmem:[%s266 + $0xd8] sm:$0xff] %vm1450, %v1438
        %1479 = vst.msk [vmem:[%s266 + $0xe0] sm:$0xff] %vm1450, %v1441
        %1480 = vst.msk [vmem:[%s266 + $0xe8] sm:$0xff] %vm1450, %v1443
        %1481 = vst.msk [vmem:[%s266 + $0xf0] sm:$0xff] %vm1450, %v1446
        %1482 = vst.msk [vmem:[%s266 + $0xf8] sm:$0xff] %vm1450, %v1448
        %s1483 = sand.u32 %s140, 1
        %s1484 = sand.u32 %s140, 1
        %s1485 = smul.addr %s1484, 256
        %s1486 = scalar_lea.vmem [#allocation7], %s1485
        // Predicated region
        $region49: #{tpu_custom_call.1} parent=39 // pred_check
          %p1487 = pneg %p150
        $region50: #{tpu_custom_call.1} parent=39 // pred_check_branch
          %1489 = sbr.rel (%p1487) target = $region52
        $region51: #{tpu_custom_call.1} parent=39 // pred_region
          %s1490 = smul.u32 32, %s22
          %s1491 = ssub.s32 38, %s1490
          %p1492 = scmp.lt.s32.totalorder %s1491, 32
          %s1493 = scalar_select %p1492, %s1491, 32
          %s1494 = smul.u32 8, %s1493
          %p1495 = scmp.ne.s32.totalorder 0, %s1494
          %s1496 = smul.addr %s1490, 8
          %s1497 = scalar_lea.vmem %s5, %s1496
          // Predicated region
          $region53: #{tpu_custom_call.1} parent=51 // pred_check
            %p1498 = pneg %p1495
          $region54: #{tpu_custom_call.1} parent=51 // pred_check_branch
            %1500 = sbr.rel (%p1498) target = $region56
          $region55: #{tpu_custom_call.1} parent=51 // pred_region
            // Predicated region
            $region57: #{tpu_custom_call.1} parent=55 // pred_check
              _
            $region58: #{tpu_custom_call.1} parent=55 // pred_check_branch
              %1502 = sbr.rel (0) target = $region60
            $region59: #{tpu_custom_call.1} parent=55 // pred_region
              // Predicated region
              $region79: #{tpu_custom_call.1} parent=59 // pred_check
                _
              $region80: #{tpu_custom_call.1} parent=59 // pred_check_branch
                %1614 = sbr.rel (0) target = $region82
              $region81: #{tpu_custom_call.1} parent=59 // pred_region
                %s1615 = sshrl.u32 %s1493, 5
                // While loop
                $region83: #{tpu_custom_call.1} parent=81 // loop_pre_header
                  _
                $region84: #{tpu_custom_call.1} parent=81 // loop_header
                  %s1617 = sphi 0, %s1619
                  %p1618 = scmp.ge.s32.totalorder %s1617, %s1615
                  %s1622 = sphi 0, %s1691
                  %s1623 = sphi %s1486, %s1694
                  %s1624 = sphi %s1497, %s1695
                $region85: #{tpu_custom_call.1} parent=81 // loop_header_branch
                  %1621 = sbr.rel (%p1618) target = $region89
                $region86: #{tpu_custom_call.1} parent=81 // loop_body
                  %v1625 = vld [vmem:[%s1623] sm:$0xff]
                  %1626 = vst [vmem:[%s1624] sm:$0xff] %v1625
                  %v1627 = vld [vmem:[%s1623 + $0x8] sm:$0xff]
                  %1628 = vst [vmem:[%s1624 + $0x8] sm:$0xff] %v1627
                  %v1629 = vld [vmem:[%s1623 + $0x10] sm:$0xff]
                  %1630 = vst [vmem:[%s1624 + $0x10] sm:$0xff] %v1629
                  %v1631 = vld [vmem:[%s1623 + $0x18] sm:$0xff]
                  %1632 = vst [vmem:[%s1624 + $0x18] sm:$0xff] %v1631
                  %v1633 = vld [vmem:[%s1623 + $0x20] sm:$0xff]
                  %1634 = vst [vmem:[%s1624 + $0x20] sm:$0xff] %v1633
                  %v1635 = vld [vmem:[%s1623 + $0x28] sm:$0xff]
                  %1636 = vst [vmem:[%s1624 + $0x28] sm:$0xff] %v1635
                  %v1637 = vld [vmem:[%s1623 + $0x30] sm:$0xff]
                  %1638 = vst [vmem:[%s1624 + $0x30] sm:$0xff] %v1637
                  %v1639 = vld [vmem:[%s1623 + $0x38] sm:$0xff]
                  %1640 = vst [vmem:[%s1624 + $0x38] sm:$0xff] %v1639
                  %v1641 = vld [vmem:[%s1623 + $0x40] sm:$0xff]
                  %1642 = vst [vmem:[%s1624 + $0x40] sm:$0xff] %v1641
                  %v1643 = vld [vmem:[%s1623 + $0x48] sm:$0xff]
                  %1644 = vst [vmem:[%s1624 + $0x48] sm:$0xff] %v1643
                  %v1645 = vld [vmem:[%s1623 + $0x50] sm:$0xff]
                  %1646 = vst [vmem:[%s1624 + $0x50] sm:$0xff] %v1645
                  %v1647 = vld [vmem:[%s1623 + $0x58] sm:$0xff]
                  %1648 = vst [vmem:[%s1624 + $0x58] sm:$0xff] %v1647
                  %v1649 = vld [vmem:[%s1623 + $0x60] sm:$0xff]
                  %1650 = vst [vmem:[%s1624 + $0x60] sm:$0xff] %v1649
                  %v1651 = vld [vmem:[%s1623 + $0x68] sm:$0xff]
                  %1652 = vst [vmem:[%s1624 + $0x68] sm:$0xff] %v1651
                  %v1653 = vld [vmem:[%s1623 + $0x70] sm:$0xff]
                  %1654 = vst [vmem:[%s1624 + $0x70] sm:$0xff] %v1653
                  %v1655 = vld [vmem:[%s1623 + $0x78] sm:$0xff]
                  %1656 = vst [vmem:[%s1624 + $0x78] sm:$0xff] %v1655
                  %v1657 = vld [vmem:[%s1623 + $0x80] sm:$0xff]
                  %1658 = vst [vmem:[%s1624 + $0x80] sm:$0xff] %v1657
                  %v1659 = vld [vmem:[%s1623 + $0x88] sm:$0xff]
                  %1660 = vst [vmem:[%s1624 + $0x88] sm:$0xff] %v1659
                  %v1661 = vld [vmem:[%s1623 + $0x90] sm:$0xff]
                  %1662 = vst [vmem:[%s1624 + $0x90] sm:$0xff] %v1661
                  %v1663 = vld [vmem:[%s1623 + $0x98] sm:$0xff]
                  %1664 = vst [vmem:[%s1624 + $0x98] sm:$0xff] %v1663
                  %v1665 = vld [vmem:[%s1623 + $0xa0] sm:$0xff]
                  %1666 = vst [vmem:[%s1624 + $0xa0] sm:$0xff] %v1665
                  %v1667 = vld [vmem:[%s1623 + $0xa8] sm:$0xff]
                  %1668 = vst [vmem:[%s1624 + $0xa8] sm:$0xff] %v1667
                  %v1669 = vld [vmem:[%s1623 + $0xb0] sm:$0xff]
                  %1670 = vst [vmem:[%s1624 + $0xb0] sm:$0xff] %v1669
                  %v1671 = vld [vmem:[%s1623 + $0xb8] sm:$0xff]
                  %1672 = vst [vmem:[%s1624 + $0xb8] sm:$0xff] %v1671
                  %v1673 = vld [vmem:[%s1623 + $0xc0] sm:$0xff]
                  %1674 = vst [vmem:[%s1624 + $0xc0] sm:$0xff] %v1673
                  %v1675 = vld [vmem:[%s1623 + $0xc8] sm:$0xff]
                  %1676 = vst [vmem:[%s1624 + $0xc8] sm:$0xff] %v1675
                  %v1677 = vld [vmem:[%s1623 + $0xd0] sm:$0xff]
                  %1678 = vst [vmem:[%s1624 + $0xd0] sm:$0xff] %v1677
                  %v1679 = vld [vmem:[%s1623 + $0xd8] sm:$0xff]
                  %1680 = vst [vmem:[%s1624 + $0xd8] sm:$0xff] %v1679
                  %v1681 = vld [vmem:[%s1623 + $0xe0] sm:$0xff]
                  %1682 = vst [vmem:[%s1624 + $0xe0] sm:$0xff] %v1681
                  %v1683 = vld [vmem:[%s1623 + $0xe8] sm:$0xff]
                  %1684 = vst [vmem:[%s1624 + $0xe8] sm:$0xff] %v1683
                  %v1685 = vld [vmem:[%s1623 + $0xf0] sm:$0xff]
                  %1686 = vst [vmem:[%s1624 + $0xf0] sm:$0xff] %v1685
                  %v1687 = vld [vmem:[%s1623 + $0xf8] sm:$0xff]
                  %1688 = vst [vmem:[%s1624 + $0xf8] sm:$0xff] %v1687
                  %s1689 = sadd.s32 1, %s1622
                  %p1690 = scmp.ge.s32.totalorder %s1689, %s1615
                  %s1691 = scalar_select %p1690, 0, %s1689
                  %s1692 = smul.u32 %s1691, 256
                  %s1693 = smul.u32 %s1691, 256
                  %s1694 = scalar_lea.vmem %s1486, %s1692 [#allocation7]
                  %s1695 = scalar_lea.vmem %s1497, %s1693
                $region87: #{tpu_custom_call.1} parent=81 // loop_footer
                  %s1619 = sadd.s32 %s1617, 1
                $region88: #{tpu_custom_call.1} parent=81 // loop_footer_branch
                  %1616 = sbr.rel target = $region84
                $region89: #{tpu_custom_call.1} parent=81 // loop_exit
                  _
                %s1696 = sshrl.u32 %s1493, 5
                %s1697 = sand.u32 %s1493, 31
                %s1698 = smul.u32 %s1696, 32
                %s1699 = smul.u32 8, %s1698
                %s1700 = scalar_lea.vmem %s1486, %s1699 [#allocation7]
                %s1701 = smul.u32 8, %s1698
                %s1702 = scalar_lea.vmem %s1497, %s1701
                // While loop
                $region90: #{tpu_custom_call.1} parent=81 // loop_pre_header
                  _
                $region91: #{tpu_custom_call.1} parent=81 // loop_header
                  %s1704 = sphi 0, %s1706
                  %p1705 = scmp.ge.s32.totalorder %s1704, %s1697
                  %s1709 = sphi 0, %s1716
                  %s1710 = sphi %s1700, %s1719
                  %s1711 = sphi %s1702, %s1720
                $region92: #{tpu_custom_call.1} parent=81 // loop_header_branch
                  %1708 = sbr.rel (%p1705) target = $region96
                $region93: #{tpu_custom_call.1} parent=81 // loop_body
                  %v1712 = vld [vmem:[%s1710] sm:$0xff]
                  %1713 = vst [vmem:[%s1711] sm:$0xff] %v1712
                  %s1714 = sadd.s32 1, %s1709
                  %p1715 = scmp.ge.s32.totalorder %s1714, %s1697
                  %s1716 = scalar_select %p1715, 0, %s1714
                  %s1717 = smul.u32 %s1716, 8
                  %s1718 = smul.u32 %s1716, 8
                  %s1719 = scalar_lea.vmem %s1700, %s1717 [#allocation7]
                  %s1720 = scalar_lea.vmem %s1702, %s1718
                $region94: #{tpu_custom_call.1} parent=81 // loop_footer
                  %s1706 = sadd.s32 %s1704, 1
                $region95: #{tpu_custom_call.1} parent=81 // loop_footer_branch
                  %1703 = sbr.rel target = $region91
                $region96: #{tpu_custom_call.1} parent=81 // loop_exit
                  _
              $region82: #{tpu_custom_call.1} parent=59 // pred_fallthru
                _
              // Predicated region
              $region97: #{tpu_custom_call.1} parent=59 // pred_check
                _
              $region98: #{tpu_custom_call.1} parent=59 // pred_check_branch
                %1722 = sbr.rel target = $region100
              $region99: #{tpu_custom_call.1} parent=59 // pred_region
                _
              $region100: #{tpu_custom_call.1} parent=59 // pred_fallthru
                _
            $region60: #{tpu_custom_call.1} parent=55 // pred_fallthru
              _
            // Predicated region
            $region61: #{tpu_custom_call.1} parent=55 // pred_check
              _
            $region62: #{tpu_custom_call.1} parent=55 // pred_check_branch
              %1504 = sbr.rel target = $region64
            $region63: #{tpu_custom_call.1} parent=55 // pred_region
              %s1506 = ssub.s32 256, 1
              %s1507 = sshrl.u32 %s1493, 5
              // While loop
              $region65: #{tpu_custom_call.1} parent=63 // loop_pre_header
                _
              $region66: #{tpu_custom_call.1} parent=63 // loop_header
                %s1509 = sphi 0, %s1511
                %p1510 = scmp.ge.s32.totalorder %s1509, %s1507
                %s1514 = sphi 0, %s1583
                %s1515 = sphi %s1486, %s1586
                %s1516 = sphi %s1497, %s1587
              $region67: #{tpu_custom_call.1} parent=63 // loop_header_branch
                %1513 = sbr.rel (%p1510) target = $region71
              $region68: #{tpu_custom_call.1} parent=63 // loop_body
                %v1517 = vld [vmem:[%s1515] sm:%s1506]
                %1518 = vst [vmem:[%s1516] sm:%s1506] %v1517
                %v1519 = vld [vmem:[%s1515 + $0x8] sm:%s1506]
                %1520 = vst [vmem:[%s1516 + $0x8] sm:%s1506] %v1519
                %v1521 = vld [vmem:[%s1515 + $0x10] sm:%s1506]
                %1522 = vst [vmem:[%s1516 + $0x10] sm:%s1506] %v1521
                %v1523 = vld [vmem:[%s1515 + $0x18] sm:%s1506]
                %1524 = vst [vmem:[%s1516 + $0x18] sm:%s1506] %v1523
                %v1525 = vld [vmem:[%s1515 + $0x20] sm:%s1506]
                %1526 = vst [vmem:[%s1516 + $0x20] sm:%s1506] %v1525
                %v1527 = vld [vmem:[%s1515 + $0x28] sm:%s1506]
                %1528 = vst [vmem:[%s1516 + $0x28] sm:%s1506] %v1527
                %v1529 = vld [vmem:[%s1515 + $0x30] sm:%s1506]
                %1530 = vst [vmem:[%s1516 + $0x30] sm:%s1506] %v1529
                %v1531 = vld [vmem:[%s1515 + $0x38] sm:%s1506]
                %1532 = vst [vmem:[%s1516 + $0x38] sm:%s1506] %v1531
                %v1533 = vld [vmem:[%s1515 + $0x40] sm:%s1506]
                %1534 = vst [vmem:[%s1516 + $0x40] sm:%s1506] %v1533
                %v1535 = vld [vmem:[%s1515 + $0x48] sm:%s1506]
                %1536 = vst [vmem:[%s1516 + $0x48] sm:%s1506] %v1535
                %v1537 = vld [vmem:[%s1515 + $0x50] sm:%s1506]
                %1538 = vst [vmem:[%s1516 + $0x50] sm:%s1506] %v1537
                %v1539 = vld [vmem:[%s1515 + $0x58] sm:%s1506]
                %1540 = vst [vmem:[%s1516 + $0x58] sm:%s1506] %v1539
                %v1541 = vld [vmem:[%s1515 + $0x60] sm:%s1506]
                %1542 = vst [vmem:[%s1516 + $0x60] sm:%s1506] %v1541
                %v1543 = vld [vmem:[%s1515 + $0x68] sm:%s1506]
                %1544 = vst [vmem:[%s1516 + $0x68] sm:%s1506] %v1543
                %v1545 = vld [vmem:[%s1515 + $0x70] sm:%s1506]
                %1546 = vst [vmem:[%s1516 + $0x70] sm:%s1506] %v1545
                %v1547 = vld [vmem:[%s1515 + $0x78] sm:%s1506]
                %1548 = vst [vmem:[%s1516 + $0x78] sm:%s1506] %v1547
                %v1549 = vld [vmem:[%s1515 + $0x80] sm:%s1506]
                %1550 = vst [vmem:[%s1516 + $0x80] sm:%s1506] %v1549
                %v1551 = vld [vmem:[%s1515 + $0x88] sm:%s1506]
                %1552 = vst [vmem:[%s1516 + $0x88] sm:%s1506] %v1551
                %v1553 = vld [vmem:[%s1515 + $0x90] sm:%s1506]
                %1554 = vst [vmem:[%s1516 + $0x90] sm:%s1506] %v1553
                %v1555 = vld [vmem:[%s1515 + $0x98] sm:%s1506]
                %1556 = vst [vmem:[%s1516 + $0x98] sm:%s1506] %v1555
                %v1557 = vld [vmem:[%s1515 + $0xa0] sm:%s1506]
                %1558 = vst [vmem:[%s1516 + $0xa0] sm:%s1506] %v1557
                %v1559 = vld [vmem:[%s1515 + $0xa8] sm:%s1506]
                %1560 = vst [vmem:[%s1516 + $0xa8] sm:%s1506] %v1559
                %v1561 = vld [vmem:[%s1515 + $0xb0] sm:%s1506]
                %1562 = vst [vmem:[%s1516 + $0xb0] sm:%s1506] %v1561
                %v1563 = vld [vmem:[%s1515 + $0xb8] sm:%s1506]
                %1564 = vst [vmem:[%s1516 + $0xb8] sm:%s1506] %v1563
                %v1565 = vld [vmem:[%s1515 + $0xc0] sm:%s1506]
                %1566 = vst [vmem:[%s1516 + $0xc0] sm:%s1506] %v1565
                %v1567 = vld [vmem:[%s1515 + $0xc8] sm:%s1506]
                %1568 = vst [vmem:[%s1516 + $0xc8] sm:%s1506] %v1567
                %v1569 = vld [vmem:[%s1515 + $0xd0] sm:%s1506]
                %1570 = vst [vmem:[%s1516 + $0xd0] sm:%s1506] %v1569
                %v1571 = vld [vmem:[%s1515 + $0xd8] sm:%s1506]
                %1572 = vst [vmem:[%s1516 + $0xd8] sm:%s1506] %v1571
                %v1573 = vld [vmem:[%s1515 + $0xe0] sm:%s1506]
                %1574 = vst [vmem:[%s1516 + $0xe0] sm:%s1506] %v1573
                %v1575 = vld [vmem:[%s1515 + $0xe8] sm:%s1506]
                %1576 = vst [vmem:[%s1516 + $0xe8] sm:%s1506] %v1575
                %v1577 = vld [vmem:[%s1515 + $0xf0] sm:%s1506]
                %1578 = vst [vmem:[%s1516 + $0xf0] sm:%s1506] %v1577
                %v1579 = vld [vmem:[%s1515 + $0xf8] sm:%s1506]
                %1580 = vst [vmem:[%s1516 + $0xf8] sm:%s1506] %v1579
                %s1581 = sadd.s32 1, %s1514
                %p1582 = scmp.ge.s32.totalorder %s1581, %s1507
                %s1583 = scalar_select %p1582, 0, %s1581
                %s1584 = smul.u32 %s1583, 256
                %s1585 = smul.u32 %s1583, 256
                %s1586 = scalar_lea.vmem %s1486, %s1584 [#allocation7]
                %s1587 = scalar_lea.vmem %s1497, %s1585
              $region69: #{tpu_custom_call.1} parent=63 // loop_footer
                %s1511 = sadd.s32 %s1509, 1
              $region70: #{tpu_custom_call.1} parent=63 // loop_footer_branch
                %1508 = sbr.rel target = $region66
              $region71: #{tpu_custom_call.1} parent=63 // loop_exit
                _
              %s1588 = sshrl.u32 %s1493, 5
              %s1589 = sand.u32 %s1493, 31
              %s1590 = smul.u32 %s1588, 32
              %s1591 = smul.u32 8, %s1590
              %s1592 = scalar_lea.vmem %s1486, %s1591 [#allocation7]
              %s1593 = smul.u32 8, %s1590
              %s1594 = scalar_lea.vmem %s1497, %s1593
              // While loop
              $region72: #{tpu_custom_call.1} parent=63 // loop_pre_header
                _
              $region73: #{tpu_custom_call.1} parent=63 // loop_header
                %s1596 = sphi 0, %s1598
                %p1597 = scmp.ge.s32.totalorder %s1596, %s1589
                %s1601 = sphi 0, %s1608
                %s1602 = sphi %s1592, %s1611
                %s1603 = sphi %s1594, %s1612
              $region74: #{tpu_custom_call.1} parent=63 // loop_header_branch
                %1600 = sbr.rel (%p1597) target = $region78
              $region75: #{tpu_custom_call.1} parent=63 // loop_body
                %v1604 = vld [vmem:[%s1602] sm:%s1506]
                %1605 = vst [vmem:[%s1603] sm:%s1506] %v1604
                %s1606 = sadd.s32 1, %s1601
                %p1607 = scmp.ge.s32.totalorder %s1606, %s1589
                %s1608 = scalar_select %p1607, 0, %s1606
                %s1609 = smul.u32 %s1608, 8
                %s1610 = smul.u32 %s1608, 8
                %s1611 = scalar_lea.vmem %s1592, %s1609 [#allocation7]
                %s1612 = scalar_lea.vmem %s1594, %s1610
              $region76: #{tpu_custom_call.1} parent=63 // loop_footer
                %s1598 = sadd.s32 %s1596, 1
              $region77: #{tpu_custom_call.1} parent=63 // loop_footer_branch
                %1595 = sbr.rel target = $region73
              $region78: #{tpu_custom_call.1} parent=63 // loop_exit
                _
            $region64: #{tpu_custom_call.1} parent=55 // pred_fallthru
              _
          $region56: #{tpu_custom_call.1} parent=51 // pred_fallthru
            _
          %1723 = vnop
        $region52: #{tpu_custom_call.1} parent=39 // pred_fallthru
          _
      $region40: #{tpu_custom_call.1} parent=5 // pred_fallthru
        _
      %p1724 = scmp.le.s32.totalorder 2, %s17
      // Predicated region
      $region101: #{tpu_custom_call.1} parent=5 // pred_check
        %p1725 = pneg %p1724
      $region102: #{tpu_custom_call.1} parent=5 // pred_check_branch
        %1727 = sbr.rel (%p1725) target = $region104
      $region103: #{tpu_custom_call.1} parent=5 // pred_region
        %s1728 = ssub.s32 %s17, 2
        // Predicated region
        $region105: #{tpu_custom_call.1} parent=103 // pred_check
          %p1729 = pneg %p156
        $region106: #{tpu_custom_call.1} parent=103 // pred_check_branch
          %1731 = sbr.rel (%p1729) target = $region108
        $region107: #{tpu_custom_call.1} parent=103 // pred_region
          %s1732 = sand.u32 %s141, 1
          %s1733 = sand.u32 %s141, 1
          %s1734 = smul.addr %s1733, 256
          %s1735 = scalar_lea.vmem [#allocation7], %s1734
        $region108: #{tpu_custom_call.1} parent=103 // pred_fallthru
          _
      $region104: #{tpu_custom_call.1} parent=5 // pred_fallthru
        _
    $region6: #{tpu_custom_call.1} parent=1 // loop_footer
      %s21 = sadd.s32 1, %s17
    $region7: #{tpu_custom_call.1} parent=1 // loop_footer_branch
      %16 = sbr.rel target = $region3
    $region8: #{tpu_custom_call.1} parent=1 // loop_exit
      _
    %1736 = vsyncpa [#allocation4], 1
    %s1737 = scalar_lea.sflag [#allocation4], 1
    %1738 = vsyncpa %s1737, 1
    %1739 = vsyncpa [#allocation6], 1

</llo_original>
